<compile_context>
chip_gen: v7x
topology: tpu7x:2x2x1
jax: 0.10.0
libtpu: 0.0.40
codegen_flags: <defaults>
</compile_context>

<pallas_src>
import functools

import jax
import jax.numpy as jnp
from jax.experimental import pallas as pl
from jax.experimental.pallas import tpu as pltpu

EPS = 1e-5        # nn.LayerNorm default
NEG_INF = -1e30   # large finite negative for masked softmax (safe in f32/bf16)
_WEIGHT_DTYPE = jnp.bfloat16


def _block_kernel(nh, hs, scale,
                  x_ref, g1_ref, b1_ref, wqkv_ref, wp_ref, bp_ref,
                  g2_ref, b2_ref, w1_ref, bb1_ref, w2_ref, bb2_ref, o_ref):
    """Whole transformer block for one batch element (grid axis 0 = batch)."""
    x = x_ref[...].astype(jnp.float32)                       # (T, E)
    T, E = x.shape

    def layernorm(v, g, b):                                   # f32 elementwise
        mu = jnp.mean(v, axis=-1, keepdims=True)
        var = jnp.mean((v - mu) ** 2, axis=-1, keepdims=True)
        return (v - mu) * jax.lax.rsqrt(var + EPS) * g + b

    # ---- multi-head causal self-attention on LayerNorm1(x) ----
    h = layernorm(x, g1_ref[...], b1_ref[...])
    # Single fused QKV matmul: (T, E) @ (E, 3E) -> (T, 3E), f32 accumulation.
    qkv = jnp.dot(h.astype(jnp.bfloat16), wqkv_ref[...],
                  preferred_element_type=jnp.float32)
    q = (qkv[:, :E] * scale).astype(jnp.bfloat16)             # fold scale once
    k = qkv[:, E:2 * E].astype(jnp.bfloat16)
    v = qkv[:, 2 * E:].astype(jnp.bfloat16)

    row = jax.lax.broadcasted_iota(jnp.int32, (T, T), 0)
    col = jax.lax.broadcasted_iota(jnp.int32, (T, T), 1)
    causal = row >= col                                       # tril mask

    wp = wp_ref[...]                                          # (nh*hs, E) bf16
    dims_qk = (((1,), (1,)), ((), ()))                        # q . k^T, no .T

    # Per-head attention with the output projection folded into the loop:
    # accumulate projected contributions into a full-width (T, E) f32 buffer
    # instead of concatenating nh lane-narrow (T, hs) slabs.
    acc = jnp.zeros((T, E), jnp.float32)
    for hd in range(nh):
        sl = slice(hd * hs, (hd + 1) * hs)
        s = jax.lax.dot_general(q[:, sl], k[:, sl], dims_qk,
                                preferred_element_type=jnp.float32)   # (T, T)
        s = jnp.where(causal, s, NEG_INF)
        s = s - jnp.max(s, axis=-1, keepdims=True)
        p = jnp.exp(s)
        p = p * pl.reciprocal(jnp.sum(p, axis=-1, keepdims=True), approx=True)
        # TODO(synk): attention dropout (p=0.2) omitted — eval-mode identity.
        o_h = jnp.dot(p.astype(jnp.bfloat16), v[:, sl],
                      preferred_element_type=jnp.float32)             # (T, hs)
        acc = acc + jnp.dot(o_h.astype(jnp.bfloat16), wp[sl, :],
                            preferred_element_type=jnp.float32)       # (T, E)
    x = x + acc + bp_ref[...]                                 # residual 1

    # ---- feed-forward on LayerNorm2(x) ----
    h2 = layernorm(x, g2_ref[...], b2_ref[...])
    ff = jnp.dot(h2.astype(jnp.bfloat16), w1_ref[...],
                 preferred_element_type=jnp.float32) + bb1_ref[...]
    ff = jnp.maximum(ff, 0.0)                                 # ReLU
    ff = jnp.dot(ff.astype(jnp.bfloat16), w2_ref[...],
                 preferred_element_type=jnp.float32) + bb2_ref[...]
    # TODO(synk): FFN dropout (p=0.2) omitted — eval-mode identity.
    o_ref[...] = (x + ff).astype(o_ref.dtype)                 # residual 2


def block_forward(x, params, nh, hs):
    B, T, E = x.shape
    H = 4 * E
    scale = float(hs) ** -0.5
    kernel = functools.partial(_block_kernel, nh, hs, scale)

    # Host-side (trace-time) weight prep: transpose to (in, out), fuse QKV,
    # cast matmul weights to bf16 (halves weight DMA bytes; accumulation is
    # f32 in-kernel).  LayerNorm params and biases stay f32.
    wqkv_t = jnp.concatenate(
        [params["wq"].T, params["wk"].T, params["wv"].T], axis=1
    ).astype(_WEIGHT_DTYPE)                                   # (E, 3E)
    wp_t = params["wp"].T.astype(_WEIGHT_DTYPE)               # (nh*hs, E)
    w1_t = params["w1"].T.astype(_WEIGHT_DTYPE)               # (E, 4E)
    w2_t = params["w2"].T.astype(_WEIGHT_DTYPE)               # (4E, E)

    args = [params["g1"], params["b1"], wqkv_t, wp_t, params["bp"],
            params["g2"], params["b2"], w1_t, params["bb1"],
            w2_t, params["bb2"]]

    def full_spec(arr):
        nd = arr.ndim
        return pl.BlockSpec(arr.shape, lambda b, _n=nd: (0,) * _n)

    # Squeezed leading (batch) dim: kernel sees (T, E) refs directly.
    in_specs = [pl.BlockSpec((None, T, E), lambda b: (b, 0, 0))]
    in_specs += [full_spec(a) for a in args]

    flops = B * (2 * T * E * 3 * E        # fused QKV
                 + 4 * T * T * E          # scores + p@v over all heads
                 + 2 * T * E * E          # output projection
                 + 2 * 2 * T * E * H)     # FFN (two matmuls)
    transcendentals = B * (nh * T * T + 2 * T)
    bytes_accessed = (2 * x.size * x.dtype.itemsize
                      + sum(int(a.size) * a.dtype.itemsize for a in args))

    return pl.pallas_call(
        kernel,
        out_shape=jax.ShapeDtypeStruct((B, T, E), x.dtype),
        grid=(B,),
        in_specs=in_specs,
        out_specs=pl.BlockSpec((None, T, E), lambda b: (b, 0, 0)),
        compiler_params=pltpu.CompilerParams(
            dimension_semantics=("parallel",)),   # batch elems independent
        cost_estimate=pl.CostEstimate(
            flops=flops, transcendentals=transcendentals,
            bytes_accessed=bytes_accessed),
    )(x, *args)


def block_reference(x, params, nh, hs):
    """Plain-JAX f32 reference matching the PyTorch forward (eval mode)."""
    def ln(v, g, b):
        mu = v.mean(-1, keepdims=True)
        var = ((v - mu) ** 2).mean(-1, keepdims=True)
        return (v - mu) / jnp.sqrt(var + EPS) * g + b

    scale = float(hs) ** -0.5
    h = ln(x, params["g1"][0], params["b1"][0])
    q = h @ params["wq"].T
    k = h @ params["wk"].T
    v = h @ params["wv"].T
    T = x.shape[1]
    mask = jnp.tril(jnp.ones((T, T), bool))
    outs = []
    for hd in range(nh):
        sl = slice(hd * hs, (hd + 1) * hs)
        s = q[..., sl] @ jnp.swapaxes(k[..., sl], -1, -2) * scale
        s = jnp.where(mask, s, -jnp.inf)
        p = jax.nn.softmax(s, axis=-1)
        outs.append(p @ v[..., sl])
    attn = jnp.concatenate(outs, -1) @ params["wp"].T + params["bp"][0]
    x = x + attn
    h2 = ln(x, params["g2"][0], params["b2"][0])
    ff = jnp.maximum(h2 @ params["w1"].T + params["bb1"][0], 0.0)
    ff = ff @ params["w2"].T + params["bb2"][0]
    return x + ff


if __name__ == "__main__":
    # Small shapes consistent with Block(number_of_embeddings, number_of_heads).
    E = 32            # number_of_embeddings (small stand-in for 384)
    N_HEADS_ARG = 4   # number_of_heads argument to Block (stand-in for 6)
    B, T = 2, 8       # batch, sequence (T <= block_size)

    # Reproduce the swapped-argument semantics of Block.__init__:
    head_size_computed = E // N_HEADS_ARG   # 8
    HS = N_HEADS_ARG                        # per-head size actually used = 4
    NH = head_size_computed                 # number of heads actually used = 8
    assert NH * HS == E

    key = jax.random.PRNGKey(0)
    ks = jax.random.split(key, 16)

    def w(k, shape, s=0.05):
        return (s * jax.random.normal(k, shape)).astype(jnp.float32)

    H = 4 * E
    params = {
        "g1": jnp.ones((1, E), jnp.float32),     # LayerNorm1 weight
        "b1": jnp.zeros((1, E), jnp.float32),    # LayerNorm1 bias
        "wq": w(ks[0], (NH * HS, E)),            # stacked per-head query weights
        "wk": w(ks[1], (NH * HS, E)),            # stacked per-head key weights
        "wv": w(ks[2], (NH * HS, E)),            # stacked per-head value weights
        "wp": w(ks[3], (E, NH * HS)),            # output projection weight
        "bp": w(ks[4], (1, E)),                  # output projection bias
        "g2": jnp.ones((1, E), jnp.float32),     # LayerNorm2 weight
        "b2": jnp.zeros((1, E), jnp.float32),    # LayerNorm2 bias
        "w1": w(ks[5], (H, E)),                  # FFN Linear(E, 4E) weight
        "bb1": w(ks[6], (1, H)),                 # FFN Linear(E, 4E) bias
        "w2": w(ks[7], (E, H)),                  # FFN Linear(4E, E) weight
        "bb2": w(ks[8], (1, E)),                 # FFN Linear(4E, E) bias
    }
    x = jax.random.normal(ks[9], (B, T, E), jnp.float32)

    out = jax.block_until_ready(block_forward(x, params, NH, HS))
    ref = block_reference(x, params, NH, HS)
    assert out.shape == (B, T, E)
    # bf16 MXU operands (f32 accumulation) vs f32 reference -> loose tolerance.
    err = float(jnp.max(jnp.abs(out - ref)))
    assert jnp.allclose(out, ref, atol=2e-2, rtol=2e-2), err
    print("KERNEL_OK")
</pallas_src>

<mosaic_0001>
module attributes {stable_mosaic.version = 11 : i64} {
  func.func @_block_kernel(%arg0: i32, %arg1: memref<1x8x32xf32, #tpu.memory_space<vmem>>, %arg2: memref<1x32xf32, #tpu.memory_space<vmem>>, %arg3: memref<1x32xf32, #tpu.memory_space<vmem>>, %arg4: memref<32x96xbf16, #tpu.memory_space<vmem>>, %arg5: memref<32x32xbf16, #tpu.memory_space<vmem>>, %arg6: memref<1x32xf32, #tpu.memory_space<vmem>>, %arg7: memref<1x32xf32, #tpu.memory_space<vmem>>, %arg8: memref<1x32xf32, #tpu.memory_space<vmem>>, %arg9: memref<32x128xbf16, #tpu.memory_space<vmem>>, %arg10: memref<1x128xf32, #tpu.memory_space<vmem>>, %arg11: memref<128x32xbf16, #tpu.memory_space<vmem>>, %arg12: memref<1x32xf32, #tpu.memory_space<vmem>>, %arg13: memref<1x8x32xf32, #tpu.memory_space<vmem>>) attributes {dimension_semantics = [#tpu.dimension_semantics<parallel>], iteration_bounds = array<i64: 2>, scalar_prefetch = 0 : i64, scratch_operands = 0 : i64, tpu.core_type = #tpu.core_type<tc>, window_params = [{transform_indices = @transform_0, window_bounds = array<i64: 1, 8, 32>}, {pipeline_mode = #tpu.pipeline_mode<synchronous>, transform_indices = @transform_1, window_bounds = array<i64: 1, 32>}, {pipeline_mode = #tpu.pipeline_mode<synchronous>, transform_indices = @transform_2, window_bounds = array<i64: 1, 32>}, {pipeline_mode = #tpu.pipeline_mode<synchronous>, transform_indices = @transform_3, window_bounds = array<i64: 32, 96>}, {pipeline_mode = #tpu.pipeline_mode<synchronous>, transform_indices = @transform_4, window_bounds = array<i64: 32, 32>}, {pipeline_mode = #tpu.pipeline_mode<synchronous>, transform_indices = @transform_5, window_bounds = array<i64: 1, 32>}, {pipeline_mode = #tpu.pipeline_mode<synchronous>, transform_indices = @transform_6, window_bounds = array<i64: 1, 32>}, {pipeline_mode = #tpu.pipeline_mode<synchronous>, transform_indices = @transform_7, window_bounds = array<i64: 1, 32>}, {pipeline_mode = #tpu.pipeline_mode<synchronous>, transform_indices = @transform_8, window_bounds = array<i64: 32, 128>}, {pipeline_mode = #tpu.pipeline_mode<synchronous>, transform_indices = @transform_9, window_bounds = array<i64: 1, 128>}, {pipeline_mode = #tpu.pipeline_mode<synchronous>, transform_indices = @transform_10, window_bounds = array<i64: 128, 32>}, {pipeline_mode = #tpu.pipeline_mode<synchronous>, transform_indices = @transform_11, window_bounds = array<i64: 1, 32>}, {transform_indices = @transform_12, window_bounds = array<i64: 1, 8, 32>}]} {
    %c0 = arith.constant 0 : index
    %c0_0 = arith.constant 0 : index
    %c0_1 = arith.constant 0 : index
    %0 = vector.load %arg1[%c0, %c0_0, %c0_1] : memref<1x8x32xf32, #tpu.memory_space<vmem>>, vector<1x8x32xf32>
    %1 = vector.shape_cast %0 : vector<1x8x32xf32> to vector<8x32xf32>
    %c0_2 = arith.constant 0 : index
    %c0_3 = arith.constant 0 : index
    %2 = vector.load %arg2[%c0_2, %c0_3] : memref<1x32xf32, #tpu.memory_space<vmem>>, vector<1x32xf32>
    %c0_4 = arith.constant 0 : index
    %c0_5 = arith.constant 0 : index
    %3 = vector.load %arg3[%c0_4, %c0_5] : memref<1x32xf32, #tpu.memory_space<vmem>>, vector<1x32xf32>
    %cst = arith.constant dense<0.000000e+00> : vector<8xf32>
    %4 = vector.multi_reduction <add>, %1, %cst [1] : vector<8x32xf32> to vector<8xf32>
    %5 = vector.shape_cast %4 : vector<8xf32> to vector<8x1xf32>
    %cst_6 = arith.constant 3.200000e+01 : f32
    %6 = vector.broadcast %cst_6 : f32 to vector<8x1xf32>
    %7 = arith.divf %5, %6 : vector<8x1xf32>
    %8 = vector.broadcast %7 : vector<8x1xf32> to vector<8x32xf32>
    %9 = arith.subf %1, %8 : vector<8x32xf32>
    %10 = arith.mulf %9, %9 : vector<8x32xf32>
    %cst_7 = arith.constant dense<0.000000e+00> : vector<8xf32>
    %11 = vector.multi_reduction <add>, %10, %cst_7 [1] : vector<8x32xf32> to vector<8xf32>
    %12 = vector.shape_cast %11 : vector<8xf32> to vector<8x1xf32>
    %cst_8 = arith.constant 3.200000e+01 : f32
    %13 = vector.broadcast %cst_8 : f32 to vector<8x1xf32>
    %14 = arith.divf %12, %13 : vector<8x1xf32>
    %15 = vector.broadcast %7 : vector<8x1xf32> to vector<8x32xf32>
    %16 = arith.subf %1, %15 : vector<8x32xf32>
    %cst_9 = arith.constant 9.99999974E-6 : f32
    %17 = vector.broadcast %cst_9 : f32 to vector<8x1xf32>
    %18 = arith.addf %14, %17 : vector<8x1xf32>
    %19 = math.rsqrt %18 : vector<8x1xf32>
    %20 = vector.broadcast %19 : vector<8x1xf32> to vector<8x32xf32>
    %21 = arith.mulf %16, %20 : vector<8x32xf32>
    %22 = vector.broadcast %2 : vector<1x32xf32> to vector<8x32xf32>
    %23 = arith.mulf %21, %22 : vector<8x32xf32>
    %24 = vector.broadcast %3 : vector<1x32xf32> to vector<8x32xf32>
    %25 = arith.addf %23, %24 : vector<8x32xf32>
    %26 = arith.truncf %25 : vector<8x32xf32> to vector<8x32xbf16>
    %c0_10 = arith.constant 0 : index
    %c0_11 = arith.constant 0 : index
    %27 = vector.load %arg4[%c0_10, %c0_11] : memref<32x96xbf16, #tpu.memory_space<vmem>>, vector<32x96xbf16>
    %cst_12 = arith.constant dense<0.000000e+00> : vector<8x96xf32>
    %28 = tpu.matmul %26, %27, %cst_12 {dimension_numbers = #tpu.dot_dimension_numbers<[1], [0], [0], [1], [0, 0, 1, 1], [], []>} : vector<8x32xbf16>, vector<32x96xbf16>, vector<8x96xf32> -> vector<8x96xf32>
    %29 = vector.extract_strided_slice %28 {offsets = [0, 0], sizes = [8, 32], strides = [1, 1]} : vector<8x96xf32> to vector<8x32xf32>
    %cst_13 = arith.constant 5.000000e-01 : f32
    %30 = vector.broadcast %cst_13 : f32 to vector<8x32xf32>
    %31 = arith.mulf %29, %30 : vector<8x32xf32>
    %32 = arith.truncf %31 : vector<8x32xf32> to vector<8x32xbf16>
    %33 = vector.extract_strided_slice %28 {offsets = [0, 32], sizes = [8, 32], strides = [1, 1]} : vector<8x96xf32> to vector<8x32xf32>
    %34 = arith.truncf %33 : vector<8x32xf32> to vector<8x32xbf16>
    %35 = vector.extract_strided_slice %28 {offsets = [0, 64], sizes = [8, 32], strides = [1, 1]} : vector<8x96xf32> to vector<8x32xf32>
    %36 = arith.truncf %35 : vector<8x32xf32> to vector<8x32xbf16>
    %37 = tpu.iota {dimensions = array<i32: 0>} : vector<8x8xi32>
    %38 = tpu.iota {dimensions = array<i32: 1>} : vector<8x8xi32>
    %39 = arith.cmpi sge, %37, %38 : vector<8x8xi32>
    %c0_14 = arith.constant 0 : index
    %c0_15 = arith.constant 0 : index
    %40 = vector.load %arg5[%c0_14, %c0_15] : memref<32x32xbf16, #tpu.memory_space<vmem>>, vector<32x32xbf16>
    %cst_16 = arith.constant 0.000000e+00 : f32
    %41 = vector.broadcast %cst_16 : f32 to vector<8x32xf32>
    %42 = vector.extract_strided_slice %32 {offsets = [0, 0], sizes = [8, 4], strides = [1, 1]} : vector<8x32xbf16> to vector<8x4xbf16>
    %43 = vector.extract_strided_slice %34 {offsets = [0, 0], sizes = [8, 4], strides = [1, 1]} : vector<8x32xbf16> to vector<8x4xbf16>
    %cst_17 = arith.constant dense<0.000000e+00> : vector<8x8xf32>
    %44 = tpu.matmul %42, %43, %cst_17 {dimension_numbers = #tpu.dot_dimension_numbers<[1], [1], [0], [0], [0, 0, 1, 0], [], []>} : vector<8x4xbf16>, vector<8x4xbf16>, vector<8x8xf32> -> vector<8x8xf32>
    %cst_18 = arith.constant -1.000000e+30 : f32
    %45 = vector.broadcast %cst_18 : f32 to vector<8x8xf32>
    %46 = arith.select %39, %44, %45 : vector<8x8xi1>, vector<8x8xf32>
    %cst_19 = arith.constant dense<0xFF800000> : vector<8xf32>
    %47 = vector.multi_reduction <maximumf>, %46, %cst_19 [1] : vector<8x8xf32> to vector<8xf32>
    %48 = vector.shape_cast %47 : vector<8xf32> to vector<8x1xf32>
    %49 = vector.broadcast %48 : vector<8x1xf32> to vector<8x8xf32>
    %50 = arith.subf %46, %49 : vector<8x8xf32>
    %51 = math.exp %50 : vector<8x8xf32>
    %cst_20 = arith.constant dense<0.000000e+00> : vector<8xf32>
    %52 = vector.multi_reduction <add>, %51, %cst_20 [1] : vector<8x8xf32> to vector<8xf32>
    %53 = vector.shape_cast %52 : vector<8xf32> to vector<8x1xf32>
    %54 = tpu.reciprocal %53 {approx = true} : vector<8x1xf32> -> vector<8x1xf32>
    %55 = vector.broadcast %54 : vector<8x1xf32> to vector<8x8xf32>
    %56 = arith.mulf %51, %55 : vector<8x8xf32>
    %57 = arith.truncf %56 : vector<8x8xf32> to vector<8x8xbf16>
    %58 = vector.extract_strided_slice %36 {offsets = [0, 0], sizes = [8, 4], strides = [1, 1]} : vector<8x32xbf16> to vector<8x4xbf16>
    %cst_21 = arith.constant dense<0.000000e+00> : vector<8x4xf32>
    %59 = tpu.matmul %57, %58, %cst_21 {dimension_numbers = #tpu.dot_dimension_numbers<[1], [0], [0], [1], [0, 0, 1, 1], [], []>} : vector<8x8xbf16>, vector<8x4xbf16>, vector<8x4xf32> -> vector<8x4xf32>
    %60 = arith.truncf %59 : vector<8x4xf32> to vector<8x4xbf16>
    %61 = vector.extract_strided_slice %40 {offsets = [0, 0], sizes = [4, 32], strides = [1, 1]} : vector<32x32xbf16> to vector<4x32xbf16>
    %cst_22 = arith.constant dense<0.000000e+00> : vector<8x32xf32>
    %62 = tpu.matmul %60, %61, %cst_22 {dimension_numbers = #tpu.dot_dimension_numbers<[1], [0], [0], [1], [0, 0, 1, 1], [], []>} : vector<8x4xbf16>, vector<4x32xbf16>, vector<8x32xf32> -> vector<8x32xf32>
    %63 = arith.addf %41, %62 : vector<8x32xf32>
    %64 = vector.extract_strided_slice %32 {offsets = [0, 4], sizes = [8, 4], strides = [1, 1]} : vector<8x32xbf16> to vector<8x4xbf16>
    %65 = vector.extract_strided_slice %34 {offsets = [0, 4], sizes = [8, 4], strides = [1, 1]} : vector<8x32xbf16> to vector<8x4xbf16>
    %cst_23 = arith.constant dense<0.000000e+00> : vector<8x8xf32>
    %66 = tpu.matmul %64, %65, %cst_23 {dimension_numbers = #tpu.dot_dimension_numbers<[1], [1], [0], [0], [0, 0, 1, 0], [], []>} : vector<8x4xbf16>, vector<8x4xbf16>, vector<8x8xf32> -> vector<8x8xf32>
    %cst_24 = arith.constant -1.000000e+30 : f32
    %67 = vector.broadcast %cst_24 : f32 to vector<8x8xf32>
    %68 = arith.select %39, %66, %67 : vector<8x8xi1>, vector<8x8xf32>
    %cst_25 = arith.constant dense<0xFF800000> : vector<8xf32>
    %69 = vector.multi_reduction <maximumf>, %68, %cst_25 [1] : vector<8x8xf32> to vector<8xf32>
    %70 = vector.shape_cast %69 : vector<8xf32> to vector<8x1xf32>
    %71 = vector.broadcast %70 : vector<8x1xf32> to vector<8x8xf32>
    %72 = arith.subf %68, %71 : vector<8x8xf32>
    %73 = math.exp %72 : vector<8x8xf32>
    %cst_26 = arith.constant dense<0.000000e+00> : vector<8xf32>
    %74 = vector.multi_reduction <add>, %73, %cst_26 [1] : vector<8x8xf32> to vector<8xf32>
    %75 = vector.shape_cast %74 : vector<8xf32> to vector<8x1xf32>
    %76 = tpu.reciprocal %75 {approx = true} : vector<8x1xf32> -> vector<8x1xf32>
    %77 = vector.broadcast %76 : vector<8x1xf32> to vector<8x8xf32>
    %78 = arith.mulf %73, %77 : vector<8x8xf32>
    %79 = arith.truncf %78 : vector<8x8xf32> to vector<8x8xbf16>
    %80 = vector.extract_strided_slice %36 {offsets = [0, 4], sizes = [8, 4], strides = [1, 1]} : vector<8x32xbf16> to vector<8x4xbf16>
    %cst_27 = arith.constant dense<0.000000e+00> : vector<8x4xf32>
    %81 = tpu.matmul %79, %80, %cst_27 {dimension_numbers = #tpu.dot_dimension_numbers<[1], [0], [0], [1], [0, 0, 1, 1], [], []>} : vector<8x8xbf16>, vector<8x4xbf16>, vector<8x4xf32> -> vector<8x4xf32>
    %82 = arith.truncf %81 : vector<8x4xf32> to vector<8x4xbf16>
    %83 = vector.extract_strided_slice %40 {offsets = [4, 0], sizes = [4, 32], strides = [1, 1]} : vector<32x32xbf16> to vector<4x32xbf16>
    %cst_28 = arith.constant dense<0.000000e+00> : vector<8x32xf32>
    %84 = tpu.matmul %82, %83, %cst_28 {dimension_numbers = #tpu.dot_dimension_numbers<[1], [0], [0], [1], [0, 0, 1, 1], [], []>} : vector<8x4xbf16>, vector<4x32xbf16>, vector<8x32xf32> -> vector<8x32xf32>
    %85 = arith.addf %63, %84 : vector<8x32xf32>
    %86 = vector.extract_strided_slice %32 {offsets = [0, 8], sizes = [8, 4], strides = [1, 1]} : vector<8x32xbf16> to vector<8x4xbf16>
    %87 = vector.extract_strided_slice %34 {offsets = [0, 8], sizes = [8, 4], strides = [1, 1]} : vector<8x32xbf16> to vector<8x4xbf16>
    %cst_29 = arith.constant dense<0.000000e+00> : vector<8x8xf32>
    %88 = tpu.matmul %86, %87, %cst_29 {dimension_numbers = #tpu.dot_dimension_numbers<[1], [1], [0], [0], [0, 0, 1, 0], [], []>} : vector<8x4xbf16>, vector<8x4xbf16>, vector<8x8xf32> -> vector<8x8xf32>
    %cst_30 = arith.constant -1.000000e+30 : f32
    %89 = vector.broadcast %cst_30 : f32 to vector<8x8xf32>
    %90 = arith.select %39, %88, %89 : vector<8x8xi1>, vector<8x8xf32>
    %cst_31 = arith.constant dense<0xFF800000> : vector<8xf32>
    %91 = vector.multi_reduction <maximumf>, %90, %cst_31 [1] : vector<8x8xf32> to vector<8xf32>
    %92 = vector.shape_cast %91 : vector<8xf32> to vector<8x1xf32>
    %93 = vector.broadcast %92 : vector<8x1xf32> to vector<8x8xf32>
    %94 = arith.subf %90, %93 : vector<8x8xf32>
    %95 = math.exp %94 : vector<8x8xf32>
    %cst_32 = arith.constant dense<0.000000e+00> : vector<8xf32>
    %96 = vector.multi_reduction <add>, %95, %cst_32 [1] : vector<8x8xf32> to vector<8xf32>
    %97 = vector.shape_cast %96 : vector<8xf32> to vector<8x1xf32>
    %98 = tpu.reciprocal %97 {approx = true} : vector<8x1xf32> -> vector<8x1xf32>
    %99 = vector.broadcast %98 : vector<8x1xf32> to vector<8x8xf32>
    %100 = arith.mulf %95, %99 : vector<8x8xf32>
    %101 = arith.truncf %100 : vector<8x8xf32> to vector<8x8xbf16>
    %102 = vector.extract_strided_slice %36 {offsets = [0, 8], sizes = [8, 4], strides = [1, 1]} : vector<8x32xbf16> to vector<8x4xbf16>
    %cst_33 = arith.constant dense<0.000000e+00> : vector<8x4xf32>
    %103 = tpu.matmul %101, %102, %cst_33 {dimension_numbers = #tpu.dot_dimension_numbers<[1], [0], [0], [1], [0, 0, 1, 1], [], []>} : vector<8x8xbf16>, vector<8x4xbf16>, vector<8x4xf32> -> vector<8x4xf32>
    %104 = arith.truncf %103 : vector<8x4xf32> to vector<8x4xbf16>
    %105 = vector.extract_strided_slice %40 {offsets = [8, 0], sizes = [4, 32], strides = [1, 1]} : vector<32x32xbf16> to vector<4x32xbf16>
    %cst_34 = arith.constant dense<0.000000e+00> : vector<8x32xf32>
    %106 = tpu.matmul %104, %105, %cst_34 {dimension_numbers = #tpu.dot_dimension_numbers<[1], [0], [0], [1], [0, 0, 1, 1], [], []>} : vector<8x4xbf16>, vector<4x32xbf16>, vector<8x32xf32> -> vector<8x32xf32>
    %107 = arith.addf %85, %106 : vector<8x32xf32>
    %108 = vector.extract_strided_slice %32 {offsets = [0, 12], sizes = [8, 4], strides = [1, 1]} : vector<8x32xbf16> to vector<8x4xbf16>
    %109 = vector.extract_strided_slice %34 {offsets = [0, 12], sizes = [8, 4], strides = [1, 1]} : vector<8x32xbf16> to vector<8x4xbf16>
    %cst_35 = arith.constant dense<0.000000e+00> : vector<8x8xf32>
    %110 = tpu.matmul %108, %109, %cst_35 {dimension_numbers = #tpu.dot_dimension_numbers<[1], [1], [0], [0], [0, 0, 1, 0], [], []>} : vector<8x4xbf16>, vector<8x4xbf16>, vector<8x8xf32> -> vector<8x8xf32>
    %cst_36 = arith.constant -1.000000e+30 : f32
    %111 = vector.broadcast %cst_36 : f32 to vector<8x8xf32>
    %112 = arith.select %39, %110, %111 : vector<8x8xi1>, vector<8x8xf32>
    %cst_37 = arith.constant dense<0xFF800000> : vector<8xf32>
    %113 = vector.multi_reduction <maximumf>, %112, %cst_37 [1] : vector<8x8xf32> to vector<8xf32>
    %114 = vector.shape_cast %113 : vector<8xf32> to vector<8x1xf32>
    %115 = vector.broadcast %114 : vector<8x1xf32> to vector<8x8xf32>
    %116 = arith.subf %112, %115 : vector<8x8xf32>
    %117 = math.exp %116 : vector<8x8xf32>
    %cst_38 = arith.constant dense<0.000000e+00> : vector<8xf32>
    %118 = vector.multi_reduction <add>, %117, %cst_38 [1] : vector<8x8xf32> to vector<8xf32>
    %119 = vector.shape_cast %118 : vector<8xf32> to vector<8x1xf32>
    %120 = tpu.reciprocal %119 {approx = true} : vector<8x1xf32> -> vector<8x1xf32>
    %121 = vector.broadcast %120 : vector<8x1xf32> to vector<8x8xf32>
    %122 = arith.mulf %117, %121 : vector<8x8xf32>
    %123 = arith.truncf %122 : vector<8x8xf32> to vector<8x8xbf16>
    %124 = vector.extract_strided_slice %36 {offsets = [0, 12], sizes = [8, 4], strides = [1, 1]} : vector<8x32xbf16> to vector<8x4xbf16>
    %cst_39 = arith.constant dense<0.000000e+00> : vector<8x4xf32>
    %125 = tpu.matmul %123, %124, %cst_39 {dimension_numbers = #tpu.dot_dimension_numbers<[1], [0], [0], [1], [0, 0, 1, 1], [], []>} : vector<8x8xbf16>, vector<8x4xbf16>, vector<8x4xf32> -> vector<8x4xf32>
    %126 = arith.truncf %125 : vector<8x4xf32> to vector<8x4xbf16>
    %127 = vector.extract_strided_slice %40 {offsets = [12, 0], sizes = [4, 32], strides = [1, 1]} : vector<32x32xbf16> to vector<4x32xbf16>
    %cst_40 = arith.constant dense<0.000000e+00> : vector<8x32xf32>
    %128 = tpu.matmul %126, %127, %cst_40 {dimension_numbers = #tpu.dot_dimension_numbers<[1], [0], [0], [1], [0, 0, 1, 1], [], []>} : vector<8x4xbf16>, vector<4x32xbf16>, vector<8x32xf32> -> vector<8x32xf32>
    %129 = arith.addf %107, %128 : vector<8x32xf32>
    %130 = vector.extract_strided_slice %32 {offsets = [0, 16], sizes = [8, 4], strides = [1, 1]} : vector<8x32xbf16> to vector<8x4xbf16>
    %131 = vector.extract_strided_slice %34 {offsets = [0, 16], sizes = [8, 4], strides = [1, 1]} : vector<8x32xbf16> to vector<8x4xbf16>
    %cst_41 = arith.constant dense<0.000000e+00> : vector<8x8xf32>
    %132 = tpu.matmul %130, %131, %cst_41 {dimension_numbers = #tpu.dot_dimension_numbers<[1], [1], [0], [0], [0, 0, 1, 0], [], []>} : vector<8x4xbf16>, vector<8x4xbf16>, vector<8x8xf32> -> vector<8x8xf32>
    %cst_42 = arith.constant -1.000000e+30 : f32
    %133 = vector.broadcast %cst_42 : f32 to vector<8x8xf32>
    %134 = arith.select %39, %132, %133 : vector<8x8xi1>, vector<8x8xf32>
    %cst_43 = arith.constant dense<0xFF800000> : vector<8xf32>
    %135 = vector.multi_reduction <maximumf>, %134, %cst_43 [1] : vector<8x8xf32> to vector<8xf32>
    %136 = vector.shape_cast %135 : vector<8xf32> to vector<8x1xf32>
    %137 = vector.broadcast %136 : vector<8x1xf32> to vector<8x8xf32>
    %138 = arith.subf %134, %137 : vector<8x8xf32>
    %139 = math.exp %138 : vector<8x8xf32>
    %cst_44 = arith.constant dense<0.000000e+00> : vector<8xf32>
    %140 = vector.multi_reduction <add>, %139, %cst_44 [1] : vector<8x8xf32> to vector<8xf32>
    %141 = vector.shape_cast %140 : vector<8xf32> to vector<8x1xf32>
    %142 = tpu.reciprocal %141 {approx = true} : vector<8x1xf32> -> vector<8x1xf32>
    %143 = vector.broadcast %142 : vector<8x1xf32> to vector<8x8xf32>
    %144 = arith.mulf %139, %143 : vector<8x8xf32>
    %145 = arith.truncf %144 : vector<8x8xf32> to vector<8x8xbf16>
    %146 = vector.extract_strided_slice %36 {offsets = [0, 16], sizes = [8, 4], strides = [1, 1]} : vector<8x32xbf16> to vector<8x4xbf16>
    %cst_45 = arith.constant dense<0.000000e+00> : vector<8x4xf32>
    %147 = tpu.matmul %145, %146, %cst_45 {dimension_numbers = #tpu.dot_dimension_numbers<[1], [0], [0], [1], [0, 0, 1, 1], [], []>} : vector<8x8xbf16>, vector<8x4xbf16>, vector<8x4xf32> -> vector<8x4xf32>
    %148 = arith.truncf %147 : vector<8x4xf32> to vector<8x4xbf16>
    %149 = vector.extract_strided_slice %40 {offsets = [16, 0], sizes = [4, 32], strides = [1, 1]} : vector<32x32xbf16> to vector<4x32xbf16>
    %cst_46 = arith.constant dense<0.000000e+00> : vector<8x32xf32>
    %150 = tpu.matmul %148, %149, %cst_46 {dimension_numbers = #tpu.dot_dimension_numbers<[1], [0], [0], [1], [0, 0, 1, 1], [], []>} : vector<8x4xbf16>, vector<4x32xbf16>, vector<8x32xf32> -> vector<8x32xf32>
    %151 = arith.addf %129, %150 : vector<8x32xf32>
    %152 = vector.extract_strided_slice %32 {offsets = [0, 20], sizes = [8, 4], strides = [1, 1]} : vector<8x32xbf16> to vector<8x4xbf16>
    %153 = vector.extract_strided_slice %34 {offsets = [0, 20], sizes = [8, 4], strides = [1, 1]} : vector<8x32xbf16> to vector<8x4xbf16>
    %cst_47 = arith.constant dense<0.000000e+00> : vector<8x8xf32>
    %154 = tpu.matmul %152, %153, %cst_47 {dimension_numbers = #tpu.dot_dimension_numbers<[1], [1], [0], [0], [0, 0, 1, 0], [], []>} : vector<8x4xbf16>, vector<8x4xbf16>, vector<8x8xf32> -> vector<8x8xf32>
    %cst_48 = arith.constant -1.000000e+30 : f32
    %155 = vector.broadcast %cst_48 : f32 to vector<8x8xf32>
    %156 = arith.select %39, %154, %155 : vector<8x8xi1>, vector<8x8xf32>
    %cst_49 = arith.constant dense<0xFF800000> : vector<8xf32>
    %157 = vector.multi_reduction <maximumf>, %156, %cst_49 [1] : vector<8x8xf32> to vector<8xf32>
    %158 = vector.shape_cast %157 : vector<8xf32> to vector<8x1xf32>
    %159 = vector.broadcast %158 : vector<8x1xf32> to vector<8x8xf32>
    %160 = arith.subf %156, %159 : vector<8x8xf32>
    %161 = math.exp %160 : vector<8x8xf32>
    %cst_50 = arith.constant dense<0.000000e+00> : vector<8xf32>
    %162 = vector.multi_reduction <add>, %161, %cst_50 [1] : vector<8x8xf32> to vector<8xf32>
    %163 = vector.shape_cast %162 : vector<8xf32> to vector<8x1xf32>
    %164 = tpu.reciprocal %163 {approx = true} : vector<8x1xf32> -> vector<8x1xf32>
    %165 = vector.broadcast %164 : vector<8x1xf32> to vector<8x8xf32>
    %166 = arith.mulf %161, %165 : vector<8x8xf32>
    %167 = arith.truncf %166 : vector<8x8xf32> to vector<8x8xbf16>
    %168 = vector.extract_strided_slice %36 {offsets = [0, 20], sizes = [8, 4], strides = [1, 1]} : vector<8x32xbf16> to vector<8x4xbf16>
    %cst_51 = arith.constant dense<0.000000e+00> : vector<8x4xf32>
    %169 = tpu.matmul %167, %168, %cst_51 {dimension_numbers = #tpu.dot_dimension_numbers<[1], [0], [0], [1], [0, 0, 1, 1], [], []>} : vector<8x8xbf16>, vector<8x4xbf16>, vector<8x4xf32> -> vector<8x4xf32>
    %170 = arith.truncf %169 : vector<8x4xf32> to vector<8x4xbf16>
    %171 = vector.extract_strided_slice %40 {offsets = [20, 0], sizes = [4, 32], strides = [1, 1]} : vector<32x32xbf16> to vector<4x32xbf16>
    %cst_52 = arith.constant dense<0.000000e+00> : vector<8x32xf32>
    %172 = tpu.matmul %170, %171, %cst_52 {dimension_numbers = #tpu.dot_dimension_numbers<[1], [0], [0], [1], [0, 0, 1, 1], [], []>} : vector<8x4xbf16>, vector<4x32xbf16>, vector<8x32xf32> -> vector<8x32xf32>
    %173 = arith.addf %151, %172 : vector<8x32xf32>
    %174 = vector.extract_strided_slice %32 {offsets = [0, 24], sizes = [8, 4], strides = [1, 1]} : vector<8x32xbf16> to vector<8x4xbf16>
    %175 = vector.extract_strided_slice %34 {offsets = [0, 24], sizes = [8, 4], strides = [1, 1]} : vector<8x32xbf16> to vector<8x4xbf16>
    %cst_53 = arith.constant dense<0.000000e+00> : vector<8x8xf32>
    %176 = tpu.matmul %174, %175, %cst_53 {dimension_numbers = #tpu.dot_dimension_numbers<[1], [1], [0], [0], [0, 0, 1, 0], [], []>} : vector<8x4xbf16>, vector<8x4xbf16>, vector<8x8xf32> -> vector<8x8xf32>
    %cst_54 = arith.constant -1.000000e+30 : f32
    %177 = vector.broadcast %cst_54 : f32 to vector<8x8xf32>
    %178 = arith.select %39, %176, %177 : vector<8x8xi1>, vector<8x8xf32>
    %cst_55 = arith.constant dense<0xFF800000> : vector<8xf32>
    %179 = vector.multi_reduction <maximumf>, %178, %cst_55 [1] : vector<8x8xf32> to vector<8xf32>
    %180 = vector.shape_cast %179 : vector<8xf32> to vector<8x1xf32>
    %181 = vector.broadcast %180 : vector<8x1xf32> to vector<8x8xf32>
    %182 = arith.subf %178, %181 : vector<8x8xf32>
    %183 = math.exp %182 : vector<8x8xf32>
    %cst_56 = arith.constant dense<0.000000e+00> : vector<8xf32>
    %184 = vector.multi_reduction <add>, %183, %cst_56 [1] : vector<8x8xf32> to vector<8xf32>
    %185 = vector.shape_cast %184 : vector<8xf32> to vector<8x1xf32>
    %186 = tpu.reciprocal %185 {approx = true} : vector<8x1xf32> -> vector<8x1xf32>
    %187 = vector.broadcast %186 : vector<8x1xf32> to vector<8x8xf32>
    %188 = arith.mulf %183, %187 : vector<8x8xf32>
    %189 = arith.truncf %188 : vector<8x8xf32> to vector<8x8xbf16>
    %190 = vector.extract_strided_slice %36 {offsets = [0, 24], sizes = [8, 4], strides = [1, 1]} : vector<8x32xbf16> to vector<8x4xbf16>
    %cst_57 = arith.constant dense<0.000000e+00> : vector<8x4xf32>
    %191 = tpu.matmul %189, %190, %cst_57 {dimension_numbers = #tpu.dot_dimension_numbers<[1], [0], [0], [1], [0, 0, 1, 1], [], []>} : vector<8x8xbf16>, vector<8x4xbf16>, vector<8x4xf32> -> vector<8x4xf32>
    %192 = arith.truncf %191 : vector<8x4xf32> to vector<8x4xbf16>
    %193 = vector.extract_strided_slice %40 {offsets = [24, 0], sizes = [4, 32], strides = [1, 1]} : vector<32x32xbf16> to vector<4x32xbf16>
    %cst_58 = arith.constant dense<0.000000e+00> : vector<8x32xf32>
    %194 = tpu.matmul %192, %193, %cst_58 {dimension_numbers = #tpu.dot_dimension_numbers<[1], [0], [0], [1], [0, 0, 1, 1], [], []>} : vector<8x4xbf16>, vector<4x32xbf16>, vector<8x32xf32> -> vector<8x32xf32>
    %195 = arith.addf %173, %194 : vector<8x32xf32>
    %196 = vector.extract_strided_slice %32 {offsets = [0, 28], sizes = [8, 4], strides = [1, 1]} : vector<8x32xbf16> to vector<8x4xbf16>
    %197 = vector.extract_strided_slice %34 {offsets = [0, 28], sizes = [8, 4], strides = [1, 1]} : vector<8x32xbf16> to vector<8x4xbf16>
    %cst_59 = arith.constant dense<0.000000e+00> : vector<8x8xf32>
    %198 = tpu.matmul %196, %197, %cst_59 {dimension_numbers = #tpu.dot_dimension_numbers<[1], [1], [0], [0], [0, 0, 1, 0], [], []>} : vector<8x4xbf16>, vector<8x4xbf16>, vector<8x8xf32> -> vector<8x8xf32>
    %cst_60 = arith.constant -1.000000e+30 : f32
    %199 = vector.broadcast %cst_60 : f32 to vector<8x8xf32>
    %200 = arith.select %39, %198, %199 : vector<8x8xi1>, vector<8x8xf32>
    %cst_61 = arith.constant dense<0xFF800000> : vector<8xf32>
    %201 = vector.multi_reduction <maximumf>, %200, %cst_61 [1] : vector<8x8xf32> to vector<8xf32>
    %202 = vector.shape_cast %201 : vector<8xf32> to vector<8x1xf32>
    %203 = vector.broadcast %202 : vector<8x1xf32> to vector<8x8xf32>
    %204 = arith.subf %200, %203 : vector<8x8xf32>
    %205 = math.exp %204 : vector<8x8xf32>
    %cst_62 = arith.constant dense<0.000000e+00> : vector<8xf32>
    %206 = vector.multi_reduction <add>, %205, %cst_62 [1] : vector<8x8xf32> to vector<8xf32>
    %207 = vector.shape_cast %206 : vector<8xf32> to vector<8x1xf32>
    %208 = tpu.reciprocal %207 {approx = true} : vector<8x1xf32> -> vector<8x1xf32>
    %209 = vector.broadcast %208 : vector<8x1xf32> to vector<8x8xf32>
    %210 = arith.mulf %205, %209 : vector<8x8xf32>
    %211 = arith.truncf %210 : vector<8x8xf32> to vector<8x8xbf16>
    %212 = vector.extract_strided_slice %36 {offsets = [0, 28], sizes = [8, 4], strides = [1, 1]} : vector<8x32xbf16> to vector<8x4xbf16>
    %cst_63 = arith.constant dense<0.000000e+00> : vector<8x4xf32>
    %213 = tpu.matmul %211, %212, %cst_63 {dimension_numbers = #tpu.dot_dimension_numbers<[1], [0], [0], [1], [0, 0, 1, 1], [], []>} : vector<8x8xbf16>, vector<8x4xbf16>, vector<8x4xf32> -> vector<8x4xf32>
    %214 = arith.truncf %213 : vector<8x4xf32> to vector<8x4xbf16>
    %215 = vector.extract_strided_slice %40 {offsets = [28, 0], sizes = [4, 32], strides = [1, 1]} : vector<32x32xbf16> to vector<4x32xbf16>
    %cst_64 = arith.constant dense<0.000000e+00> : vector<8x32xf32>
    %216 = tpu.matmul %214, %215, %cst_64 {dimension_numbers = #tpu.dot_dimension_numbers<[1], [0], [0], [1], [0, 0, 1, 1], [], []>} : vector<8x4xbf16>, vector<4x32xbf16>, vector<8x32xf32> -> vector<8x32xf32>
    %217 = arith.addf %195, %216 : vector<8x32xf32>
    %218 = arith.addf %1, %217 : vector<8x32xf32>
    %c0_65 = arith.constant 0 : index
    %c0_66 = arith.constant 0 : index
    %219 = vector.load %arg6[%c0_65, %c0_66] : memref<1x32xf32, #tpu.memory_space<vmem>>, vector<1x32xf32>
    %220 = vector.broadcast %219 : vector<1x32xf32> to vector<8x32xf32>
    %221 = arith.addf %218, %220 : vector<8x32xf32>
    %c0_67 = arith.constant 0 : index
    %c0_68 = arith.constant 0 : index
    %222 = vector.load %arg7[%c0_67, %c0_68] : memref<1x32xf32, #tpu.memory_space<vmem>>, vector<1x32xf32>
    %c0_69 = arith.constant 0 : index
    %c0_70 = arith.constant 0 : index
    %223 = vector.load %arg8[%c0_69, %c0_70] : memref<1x32xf32, #tpu.memory_space<vmem>>, vector<1x32xf32>
    %cst_71 = arith.constant dense<0.000000e+00> : vector<8xf32>
    %224 = vector.multi_reduction <add>, %221, %cst_71 [1] : vector<8x32xf32> to vector<8xf32>
    %225 = vector.shape_cast %224 : vector<8xf32> to vector<8x1xf32>
    %cst_72 = arith.constant 3.200000e+01 : f32
    %226 = vector.broadcast %cst_72 : f32 to vector<8x1xf32>
    %227 = arith.divf %225, %226 : vector<8x1xf32>
    %228 = vector.broadcast %227 : vector<8x1xf32> to vector<8x32xf32>
    %229 = arith.subf %221, %228 : vector<8x32xf32>
    %230 = arith.mulf %229, %229 : vector<8x32xf32>
    %cst_73 = arith.constant dense<0.000000e+00> : vector<8xf32>
    %231 = vector.multi_reduction <add>, %230, %cst_73 [1] : vector<8x32xf32> to vector<8xf32>
    %232 = vector.shape_cast %231 : vector<8xf32> to vector<8x1xf32>
    %cst_74 = arith.constant 3.200000e+01 : f32
    %233 = vector.broadcast %cst_74 : f32 to vector<8x1xf32>
    %234 = arith.divf %232, %233 : vector<8x1xf32>
    %235 = vector.broadcast %227 : vector<8x1xf32> to vector<8x32xf32>
    %236 = arith.subf %221, %235 : vector<8x32xf32>
    %cst_75 = arith.constant 9.99999974E-6 : f32
    %237 = vector.broadcast %cst_75 : f32 to vector<8x1xf32>
    %238 = arith.addf %234, %237 : vector<8x1xf32>
    %239 = math.rsqrt %238 : vector<8x1xf32>
    %240 = vector.broadcast %239 : vector<8x1xf32> to vector<8x32xf32>
    %241 = arith.mulf %236, %240 : vector<8x32xf32>
    %242 = vector.broadcast %222 : vector<1x32xf32> to vector<8x32xf32>
    %243 = arith.mulf %241, %242 : vector<8x32xf32>
    %244 = vector.broadcast %223 : vector<1x32xf32> to vector<8x32xf32>
    %245 = arith.addf %243, %244 : vector<8x32xf32>
    %246 = arith.truncf %245 : vector<8x32xf32> to vector<8x32xbf16>
    %c0_76 = arith.constant 0 : index
    %c0_77 = arith.constant 0 : index
    %247 = vector.load %arg9[%c0_76, %c0_77] : memref<32x128xbf16, #tpu.memory_space<vmem>>, vector<32x128xbf16>
    %cst_78 = arith.constant dense<0.000000e+00> : vector<8x128xf32>
    %248 = tpu.matmul %246, %247, %cst_78 {dimension_numbers = #tpu.dot_dimension_numbers<[1], [0], [0], [1], [0, 0, 1, 1], [], []>} : vector<8x32xbf16>, vector<32x128xbf16>, vector<8x128xf32> -> vector<8x128xf32>
    %c0_79 = arith.constant 0 : index
    %c0_80 = arith.constant 0 : index
    %249 = vector.load %arg10[%c0_79, %c0_80] : memref<1x128xf32, #tpu.memory_space<vmem>>, vector<1x128xf32>
    %250 = vector.broadcast %249 : vector<1x128xf32> to vector<8x128xf32>
    %251 = arith.addf %248, %250 : vector<8x128xf32>
    %cst_81 = arith.constant 0.000000e+00 : f32
    %252 = vector.broadcast %cst_81 : f32 to vector<8x128xf32>
    %253 = arith.maximumf %251, %252 : vector<8x128xf32>
    %254 = arith.truncf %253 : vector<8x128xf32> to vector<8x128xbf16>
    %c0_82 = arith.constant 0 : index
    %c0_83 = arith.constant 0 : index
    %255 = vector.load %arg11[%c0_82, %c0_83] : memref<128x32xbf16, #tpu.memory_space<vmem>>, vector<128x32xbf16>
    %cst_84 = arith.constant dense<0.000000e+00> : vector<8x32xf32>
    %256 = tpu.matmul %254, %255, %cst_84 {dimension_numbers = #tpu.dot_dimension_numbers<[1], [0], [0], [1], [0, 0, 1, 1], [], []>} : vector<8x128xbf16>, vector<128x32xbf16>, vector<8x32xf32> -> vector<8x32xf32>
    %c0_85 = arith.constant 0 : index
    %c0_86 = arith.constant 0 : index
    %257 = vector.load %arg12[%c0_85, %c0_86] : memref<1x32xf32, #tpu.memory_space<vmem>>, vector<1x32xf32>
    %258 = vector.broadcast %257 : vector<1x32xf32> to vector<8x32xf32>
    %259 = arith.addf %256, %258 : vector<8x32xf32>
    %260 = arith.addf %221, %259 : vector<8x32xf32>
    %c0_87 = arith.constant 0 : index
    %c0_88 = arith.constant 0 : index
    %c0_89 = arith.constant 0 : index
    %261 = vector.load %arg13[%c0_87, %c0_88, %c0_89] : memref<1x8x32xf32, #tpu.memory_space<vmem>>, vector<1x8x32xf32>
    %262 = vector.shape_cast %261 : vector<1x8x32xf32> to vector<8x32xf32>
    %263 = vector.shape_cast %260 : vector<8x32xf32> to vector<1x8x32xf32>
    tpu.vector_store %arg13[%c0_87, %c0_88, %c0_89], %263 {strides = array<i32>} : memref<1x8x32xf32, #tpu.memory_space<vmem>>, vector<1x8x32xf32>,
    return
  }
  func.func @transform_0(%arg0: i32) -> (i32, i32, i32) {
    %c0_i32 = arith.constant 0 : i32
    %c0_i32_0 = arith.constant 0 : i32
    %c0_i32_1 = arith.constant 0 : i32
    return %arg0, %c0_i32, %c0_i32_0 : i32, i32, i32
  }
  func.func @transform_1(%arg0: i32) -> (i32, i32) {
    %c0_i32 = arith.constant 0 : i32
    %c0_i32_0 = arith.constant 0 : i32
    %c0_i32_1 = arith.constant 0 : i32
    return %c0_i32, %c0_i32_0 : i32, i32
  }
  func.func @transform_2(%arg0: i32) -> (i32, i32) {
    %c0_i32 = arith.constant 0 : i32
    %c0_i32_0 = arith.constant 0 : i32
    %c0_i32_1 = arith.constant 0 : i32
    return %c0_i32, %c0_i32_0 : i32, i32
  }
  func.func @transform_3(%arg0: i32) -> (i32, i32) {
    %c0_i32 = arith.constant 0 : i32
    %c0_i32_0 = arith.constant 0 : i32
    %c0_i32_1 = arith.constant 0 : i32
    return %c0_i32, %c0_i32_0 : i32, i32
  }
  func.func @transform_4(%arg0: i32) -> (i32, i32) {
    %c0_i32 = arith.constant 0 : i32
    %c0_i32_0 = arith.constant 0 : i32
    %c0_i32_1 = arith.constant 0 : i32
    return %c0_i32, %c0_i32_0 : i32, i32
  }
  func.func @transform_5(%arg0: i32) -> (i32, i32) {
    %c0_i32 = arith.constant 0 : i32
    %c0_i32_0 = arith.constant 0 : i32
    %c0_i32_1 = arith.constant 0 : i32
    return %c0_i32, %c0_i32_0 : i32, i32
  }
  func.func @transform_6(%arg0: i32) -> (i32, i32) {
    %c0_i32 = arith.constant 0 : i32
    %c0_i32_0 = arith.constant 0 : i32
    %c0_i32_1 = arith.constant 0 : i32
    return %c0_i32, %c0_i32_0 : i32, i32
  }
  func.func @transform_7(%arg0: i32) -> (i32, i32) {
    %c0_i32 = arith.constant 0 : i32
    %c0_i32_0 = arith.constant 0 : i32
    %c0_i32_1 = arith.constant 0 : i32
    return %c0_i32, %c0_i32_0 : i32, i32
  }
  func.func @transform_8(%arg0: i32) -> (i32, i32) {
    %c0_i32 = arith.constant 0 : i32
    %c0_i32_0 = arith.constant 0 : i32
    %c0_i32_1 = arith.constant 0 : i32
    return %c0_i32, %c0_i32_0 : i32, i32
  }
  func.func @transform_9(%arg0: i32) -> (i32, i32) {
    %c0_i32 = arith.constant 0 : i32
    %c0_i32_0 = arith.constant 0 : i32
    %c0_i32_1 = arith.constant 0 : i32
    return %c0_i32, %c0_i32_0 : i32, i32
  }
  func.func @transform_10(%arg0: i32) -> (i32, i32) {
    %c0_i32 = arith.constant 0 : i32
    %c0_i32_0 = arith.constant 0 : i32
    %c0_i32_1 = arith.constant 0 : i32
    return %c0_i32, %c0_i32_0 : i32, i32
  }
  func.func @transform_11(%arg0: i32) -> (i32, i32) {
    %c0_i32 = arith.constant 0 : i32
    %c0_i32_0 = arith.constant 0 : i32
    %c0_i32_1 = arith.constant 0 : i32
    return %c0_i32, %c0_i32_0 : i32, i32
  }
  func.func @transform_12(%arg0: i32) -> (i32, i32, i32) {
    %c0_i32 = arith.constant 0 : i32
    %c0_i32_0 = arith.constant 0 : i32
    %c0_i32_1 = arith.constant 0 : i32
    return %arg0, %c0_i32, %c0_i32_0 : i32, i32, i32
  }
}

</mosaic_0001>

<llo_original>
// kernel: tpu_custom_call.1
$region0: #{tpu_custom_call.1}
  #allocation0 [shape = 'u32[]', space=smem, size = 0x4, offset = 0x4, fixed_abs, tag = 'smem constant byte address 0x4 - core index']
  #allocation1 [shape = 'u32[144,128]{1,0:T(1,128)}', space=vmem, size = 0x12000, scoped, tag = 'internal scratch']
  %s0 = inlined_call_operand.vmem [shape: f32[2,8,32], index: 0, kind: input, shape index: {}]
  %s1 = inlined_call_operand.vmem [shape: f32[1,32], index: 1, kind: input, shape index: {}]
  %s2 = inlined_call_operand.vmem [shape: f32[1,32], index: 2, kind: input, shape index: {}]
  %s3 = inlined_call_operand.vmem [shape: bf16[32,96], index: 3, kind: input, shape index: {}]
  %s4 = inlined_call_operand.vmem [shape: bf16[32,32], index: 4, kind: input, shape index: {}]
  %s5 = inlined_call_operand.vmem [shape: f32[1,32], index: 5, kind: input, shape index: {}]
  %s6 = inlined_call_operand.vmem [shape: f32[1,32], index: 6, kind: input, shape index: {}]
  %s7 = inlined_call_operand.vmem [shape: f32[1,32], index: 7, kind: input, shape index: {}]
  %s8 = inlined_call_operand.vmem [shape: bf16[32,128], index: 8, kind: input, shape index: {}]
  %s9 = inlined_call_operand.vmem [shape: f32[1,128], index: 9, kind: input, shape index: {}]
  %s10 = inlined_call_operand.vmem [shape: bf16[128,32], index: 10, kind: input, shape index: {}]
  %s11 = inlined_call_operand.vmem [shape: f32[1,32], index: 11, kind: input, shape index: {}]
  %s12 = inlined_call_operand.hbm [shape: f32[2,8,32], index: 12, kind: output, shape index: {}]
  %s13 = sld [smem:[#allocation0]]
  $region81: #{tpu_custom_call.1} parent=0
    _
  %s15 = ssub.s32 1, %s13
  %s16 = scalar_select 0, %s15, %s13
  $region1: #{tpu_custom_call.1} parent=0
    #allocation2 [shape = 'u8[8192]{0}', space=vmem, size = 0x2000, scoped, tag = 'output window, operand 0']
    #allocation3 [shape = 's32[2]{0}', space=sflag, size = 0x8, scoped, tag = 'scoped memory for tpu_custom_call.1']
    %17 = vsyncpa [#allocation3], 0
    %s18 = scalar_lea.sflag [#allocation3], 1
    %19 = vsyncpa %s18, 0
    loop: start=0, step=1, limit=4
    $region2: #{tpu_custom_call.1} parent=1 // loop_pre_header
      _
    $region3: #{tpu_custom_call.1} parent=1 // loop_header
      %s21 = sphi 0, %s25
      %p22 = scmp.ge.s32.totalorder %s21, 4
      %s31 = sphi 0, %s33
      %s34 = sphi 0, %s31
      %s35 = sphi 0, %s34
      %s51 = sphi 0, %s35
      %s55 = sphi 0, %s55
      %s57 = sphi 0, %s55
      %s58 = sphi 0, %s57
      %s72 = sphi 0, %s58
      %s76 = sphi 0, %s76
      %s78 = sphi 0, %s76
      %s79 = sphi 0, %s78
      %s93 = sphi 0, %s79
      %s97 = sphi 0, %s97
      %s99 = sphi 0, %s97
      %s100 = sphi 0, %s99
      %s114 = sphi 0, %s100
      %s118 = sphi 0, %s118
      %s120 = sphi 0, %s118
      %s121 = sphi 0, %s120
      %s135 = sphi 0, %s121
      %s139 = sphi 0, %s139
      %s141 = sphi 0, %s139
      %s142 = sphi 0, %s141
      %s156 = sphi 0, %s142
      %s160 = sphi 0, %s160
      %s162 = sphi 0, %s160
      %s163 = sphi 0, %s162
      %s177 = sphi 0, %s163
      %s181 = sphi 0, %s181
      %s183 = sphi 0, %s181
      %s184 = sphi 0, %s183
      %s198 = sphi 0, %s184
      %s202 = sphi 0, %s202
      %s204 = sphi 0, %s202
      %s205 = sphi 0, %s204
      %s219 = sphi 0, %s205
      %s223 = sphi 0, %s223
      %s225 = sphi 0, %s223
      %s226 = sphi 0, %s225
      %s240 = sphi 0, %s226
      %s244 = sphi 0, %s244
      %s246 = sphi 0, %s244
      %s247 = sphi 0, %s246
      %s261 = sphi 0, %s247
      %s265 = sphi 0, %s265
      %s267 = sphi 0, %s265
      %s268 = sphi 0, %s267
      %s282 = sphi 0, %s268
      %s288 = sphi 0, %s290
      %s291 = sphi 0, %s288
      %s292 = sphi 0, %s291
      %s308 = sphi 0, %s292
    $region4: #{tpu_custom_call.1} parent=1 // loop_header_branch
      %24 = sbr.rel (%p22) target = $region8
    $region5: #{tpu_custom_call.1} parent=1 // loop_body
      %s26 = ssub.s32 %s21, 1
      %s27 = ssub.s32 %s21, 2
      %s28 = sadd.s32 %s21, 1
      %s29 = ssub.s32 %s21, %s28
      %p30 = scmp.eq.s32.totalorder %s29, 0
      %s32 = sadd.s32 %s31, 1
      %s33 = scalar_select %p30, %s31, %s32
      %p36 = pneg %p30
      %p37 = scmp.eq.s32.totalorder %s21, 1
      %p38 = por %p36, %p37
      %p39 = scmp.ne.s32.totalorder %s31, %s34
      %p40 = scmp.eq.s32.totalorder %s21, 0
      %p41 = por %p39, %p40
      %p42 = scmp.ne.s32.totalorder %s31, %s34
      %p43 = scmp.eq.s32.totalorder %s26, 1
      %p44 = por %p42, %p43
      %p45 = scmp.ne.s32.totalorder %s34, %s35
      %p46 = scmp.eq.s32.totalorder %s26, 0
      %p47 = por %p45, %p46
      %p48 = scmp.ne.s32.totalorder %s34, %s35
      %p49 = scmp.eq.s32.totalorder %s27, 1
      %p50 = por %p48, %p49
      %p52 = scmp.ne.s32.totalorder %s35, %s51
      %p53 = scmp.eq.s32.totalorder %s27, 0
      %p54 = por %p52, %p53
      %s56 = sadd.s32 %s55, 1
      %p59 = scmp.eq.s32.totalorder %s21, 1
      %p60 = scmp.ne.s32.totalorder %s55, %s57
      %p61 = scmp.eq.s32.totalorder %s21, 0
      %p62 = por %p60, %p61
      %p63 = scmp.ne.s32.totalorder %s55, %s57
      %p64 = scmp.eq.s32.totalorder %s26, 1
      %p65 = por %p63, %p64
      %p66 = scmp.ne.s32.totalorder %s57, %s58
      %p67 = scmp.eq.s32.totalorder %s26, 0
      %p68 = por %p66, %p67
      %p69 = scmp.ne.s32.totalorder %s57, %s58
      %p70 = scmp.eq.s32.totalorder %s27, 1
      %p71 = por %p69, %p70
      %p73 = scmp.ne.s32.totalorder %s58, %s72
      %p74 = scmp.eq.s32.totalorder %s27, 0
      %p75 = por %p73, %p74
      %s77 = sadd.s32 %s76, 1
      %p80 = scmp.eq.s32.totalorder %s21, 1
      %p81 = scmp.ne.s32.totalorder %s76, %s78
      %p82 = scmp.eq.s32.totalorder %s21, 0
      %p83 = por %p81, %p82
      %p84 = scmp.ne.s32.totalorder %s76, %s78
      %p85 = scmp.eq.s32.totalorder %s26, 1
      %p86 = por %p84, %p85
      %p87 = scmp.ne.s32.totalorder %s78, %s79
      %p88 = scmp.eq.s32.totalorder %s26, 0
      %p89 = por %p87, %p88
      %p90 = scmp.ne.s32.totalorder %s78, %s79
      %p91 = scmp.eq.s32.totalorder %s27, 1
      %p92 = por %p90, %p91
      %p94 = scmp.ne.s32.totalorder %s79, %s93
      %p95 = scmp.eq.s32.totalorder %s27, 0
      %p96 = por %p94, %p95
      %s98 = sadd.s32 %s97, 1
      %p101 = scmp.eq.s32.totalorder %s21, 1
      %p102 = scmp.ne.s32.totalorder %s97, %s99
      %p103 = scmp.eq.s32.totalorder %s21, 0
      %p104 = por %p102, %p103
      %p105 = scmp.ne.s32.totalorder %s97, %s99
      %p106 = scmp.eq.s32.totalorder %s26, 1
      %p107 = por %p105, %p106
      %p108 = scmp.ne.s32.totalorder %s99, %s100
      %p109 = scmp.eq.s32.totalorder %s26, 0
      %p110 = por %p108, %p109
      %p111 = scmp.ne.s32.totalorder %s99, %s100
      %p112 = scmp.eq.s32.totalorder %s27, 1
      %p113 = por %p111, %p112
      %p115 = scmp.ne.s32.totalorder %s100, %s114
      %p116 = scmp.eq.s32.totalorder %s27, 0
      %p117 = por %p115, %p116
      %s119 = sadd.s32 %s118, 1
      %p122 = scmp.eq.s32.totalorder %s21, 1
      %p123 = scmp.ne.s32.totalorder %s118, %s120
      %p124 = scmp.eq.s32.totalorder %s21, 0
      %p125 = por %p123, %p124
      %p126 = scmp.ne.s32.totalorder %s118, %s120
      %p127 = scmp.eq.s32.totalorder %s26, 1
      %p128 = por %p126, %p127
      %p129 = scmp.ne.s32.totalorder %s120, %s121
      %p130 = scmp.eq.s32.totalorder %s26, 0
      %p131 = por %p129, %p130
      %p132 = scmp.ne.s32.totalorder %s120, %s121
      %p133 = scmp.eq.s32.totalorder %s27, 1
      %p134 = por %p132, %p133
      %p136 = scmp.ne.s32.totalorder %s121, %s135
      %p137 = scmp.eq.s32.totalorder %s27, 0
      %p138 = por %p136, %p137
      %s140 = sadd.s32 %s139, 1
      %p143 = scmp.eq.s32.totalorder %s21, 1
      %p144 = scmp.ne.s32.totalorder %s139, %s141
      %p145 = scmp.eq.s32.totalorder %s21, 0
      %p146 = por %p144, %p145
      %p147 = scmp.ne.s32.totalorder %s139, %s141
      %p148 = scmp.eq.s32.totalorder %s26, 1
      %p149 = por %p147, %p148
      %p150 = scmp.ne.s32.totalorder %s141, %s142
      %p151 = scmp.eq.s32.totalorder %s26, 0
      %p152 = por %p150, %p151
      %p153 = scmp.ne.s32.totalorder %s141, %s142
      %p154 = scmp.eq.s32.totalorder %s27, 1
      %p155 = por %p153, %p154
      %p157 = scmp.ne.s32.totalorder %s142, %s156
      %p158 = scmp.eq.s32.totalorder %s27, 0
      %p159 = por %p157, %p158
      %s161 = sadd.s32 %s160, 1
      %p164 = scmp.eq.s32.totalorder %s21, 1
      %p165 = scmp.ne.s32.totalorder %s160, %s162
      %p166 = scmp.eq.s32.totalorder %s21, 0
      %p167 = por %p165, %p166
      %p168 = scmp.ne.s32.totalorder %s160, %s162
      %p169 = scmp.eq.s32.totalorder %s26, 1
      %p170 = por %p168, %p169
      %p171 = scmp.ne.s32.totalorder %s162, %s163
      %p172 = scmp.eq.s32.totalorder %s26, 0
      %p173 = por %p171, %p172
      %p174 = scmp.ne.s32.totalorder %s162, %s163
      %p175 = scmp.eq.s32.totalorder %s27, 1
      %p176 = por %p174, %p175
      %p178 = scmp.ne.s32.totalorder %s163, %s177
      %p179 = scmp.eq.s32.totalorder %s27, 0
      %p180 = por %p178, %p179
      %s182 = sadd.s32 %s181, 1
      %p185 = scmp.eq.s32.totalorder %s21, 1
      %p186 = scmp.ne.s32.totalorder %s181, %s183
      %p187 = scmp.eq.s32.totalorder %s21, 0
      %p188 = por %p186, %p187
      %p189 = scmp.ne.s32.totalorder %s181, %s183
      %p190 = scmp.eq.s32.totalorder %s26, 1
      %p191 = por %p189, %p190
      %p192 = scmp.ne.s32.totalorder %s183, %s184
      %p193 = scmp.eq.s32.totalorder %s26, 0
      %p194 = por %p192, %p193
      %p195 = scmp.ne.s32.totalorder %s183, %s184
      %p196 = scmp.eq.s32.totalorder %s27, 1
      %p197 = por %p195, %p196
      %p199 = scmp.ne.s32.totalorder %s184, %s198
      %p200 = scmp.eq.s32.totalorder %s27, 0
      %p201 = por %p199, %p200
      %s203 = sadd.s32 %s202, 1
      %p206 = scmp.eq.s32.totalorder %s21, 1
      %p207 = scmp.ne.s32.totalorder %s202, %s204
      %p208 = scmp.eq.s32.totalorder %s21, 0
      %p209 = por %p207, %p208
      %p210 = scmp.ne.s32.totalorder %s202, %s204
      %p211 = scmp.eq.s32.totalorder %s26, 1
      %p212 = por %p210, %p211
      %p213 = scmp.ne.s32.totalorder %s204, %s205
      %p214 = scmp.eq.s32.totalorder %s26, 0
      %p215 = por %p213, %p214
      %p216 = scmp.ne.s32.totalorder %s204, %s205
      %p217 = scmp.eq.s32.totalorder %s27, 1
      %p218 = por %p216, %p217
      %p220 = scmp.ne.s32.totalorder %s205, %s219
      %p221 = scmp.eq.s32.totalorder %s27, 0
      %p222 = por %p220, %p221
      %s224 = sadd.s32 %s223, 1
      %p227 = scmp.eq.s32.totalorder %s21, 1
      %p228 = scmp.ne.s32.totalorder %s223, %s225
      %p229 = scmp.eq.s32.totalorder %s21, 0
      %p230 = por %p228, %p229
      %p231 = scmp.ne.s32.totalorder %s223, %s225
      %p232 = scmp.eq.s32.totalorder %s26, 1
      %p233 = por %p231, %p232
      %p234 = scmp.ne.s32.totalorder %s225, %s226
      %p235 = scmp.eq.s32.totalorder %s26, 0
      %p236 = por %p234, %p235
      %p237 = scmp.ne.s32.totalorder %s225, %s226
      %p238 = scmp.eq.s32.totalorder %s27, 1
      %p239 = por %p237, %p238
      %p241 = scmp.ne.s32.totalorder %s226, %s240
      %p242 = scmp.eq.s32.totalorder %s27, 0
      %p243 = por %p241, %p242
      %s245 = sadd.s32 %s244, 1
      %p248 = scmp.eq.s32.totalorder %s21, 1
      %p249 = scmp.ne.s32.totalorder %s244, %s246
      %p250 = scmp.eq.s32.totalorder %s21, 0
      %p251 = por %p249, %p250
      %p252 = scmp.ne.s32.totalorder %s244, %s246
      %p253 = scmp.eq.s32.totalorder %s26, 1
      %p254 = por %p252, %p253
      %p255 = scmp.ne.s32.totalorder %s246, %s247
      %p256 = scmp.eq.s32.totalorder %s26, 0
      %p257 = por %p255, %p256
      %p258 = scmp.ne.s32.totalorder %s246, %s247
      %p259 = scmp.eq.s32.totalorder %s27, 1
      %p260 = por %p258, %p259
      %p262 = scmp.ne.s32.totalorder %s247, %s261
      %p263 = scmp.eq.s32.totalorder %s27, 0
      %p264 = por %p262, %p263
      %s266 = sadd.s32 %s265, 1
      %p269 = scmp.eq.s32.totalorder %s21, 1
      %p270 = scmp.ne.s32.totalorder %s265, %s267
      %p271 = scmp.eq.s32.totalorder %s21, 0
      %p272 = por %p270, %p271
      %p273 = scmp.ne.s32.totalorder %s265, %s267
      %p274 = scmp.eq.s32.totalorder %s26, 1
      %p275 = por %p273, %p274
      %p276 = scmp.ne.s32.totalorder %s267, %s268
      %p277 = scmp.eq.s32.totalorder %s26, 0
      %p278 = por %p276, %p277
      %p279 = scmp.ne.s32.totalorder %s267, %s268
      %p280 = scmp.eq.s32.totalorder %s27, 1
      %p281 = por %p279, %p280
      %p283 = scmp.ne.s32.totalorder %s268, %s282
      %p284 = scmp.eq.s32.totalorder %s27, 0
      %p285 = por %p283, %p284
      %s286 = ssub.s32 %s21, %s28
      %p287 = scmp.eq.s32.totalorder %s286, 0
      %s289 = sadd.s32 %s288, 1
      %s290 = scalar_select %p287, %s288, %s289
      %p293 = pneg %p287
      %p294 = scmp.eq.s32.totalorder %s21, 1
      %p295 = por %p293, %p294
      %p296 = scmp.ne.s32.totalorder %s288, %s291
      %p297 = scmp.eq.s32.totalorder %s21, 0
      %p298 = por %p296, %p297
      %p299 = scmp.ne.s32.totalorder %s288, %s291
      %p300 = scmp.eq.s32.totalorder %s26, 1
      %p301 = por %p299, %p300
      %p302 = scmp.ne.s32.totalorder %s291, %s292
      %p303 = scmp.eq.s32.totalorder %s26, 0
      %p304 = por %p302, %p303
      %p305 = scmp.ne.s32.totalorder %s291, %s292
      %p306 = scmp.eq.s32.totalorder %s27, 1
      %p307 = por %p305, %p306
      %p309 = scmp.ne.s32.totalorder %s292, %s308
      %p310 = scmp.eq.s32.totalorder %s27, 0
      %p311 = por %p309, %p310
      %p312 = scmp.le.s32.totalorder 1, %s21
      %p313 = scmp.lt.s32.totalorder %s21, 3
      %p314 = pnand %p312, %p313
      %p315 = pneg %p314
      // Predicated region
      $region9: #{tpu_custom_call.1} parent=5 // pred_check
        _
      $region10: #{tpu_custom_call.1} parent=5 // pred_check_branch
        %317 = sbr.rel (%p314) target = $region12
      $region11: #{tpu_custom_call.1} parent=5 // pred_region
        %s318 = ssub.s32 %s21, 1
        // Predicated region
        $region13: #{tpu_custom_call.1} parent=11 // pred_check
          %p319 = pneg %p68
        $region14: #{tpu_custom_call.1} parent=11 // pred_check_branch
          %321 = sbr.rel (%p319) target = $region16
        $region15: #{tpu_custom_call.1} parent=11 // pred_region
          _
        $region16: #{tpu_custom_call.1} parent=11 // pred_fallthru
          _
        // Predicated region
        $region17: #{tpu_custom_call.1} parent=11 // pred_check
          %p322 = pneg %p89
        $region18: #{tpu_custom_call.1} parent=11 // pred_check_branch
          %324 = sbr.rel (%p322) target = $region20
        $region19: #{tpu_custom_call.1} parent=11 // pred_region
          _
        $region20: #{tpu_custom_call.1} parent=11 // pred_fallthru
          _
        // Predicated region
        $region21: #{tpu_custom_call.1} parent=11 // pred_check
          %p325 = pneg %p110
        $region22: #{tpu_custom_call.1} parent=11 // pred_check_branch
          %327 = sbr.rel (%p325) target = $region24
        $region23: #{tpu_custom_call.1} parent=11 // pred_region
          _
        $region24: #{tpu_custom_call.1} parent=11 // pred_fallthru
          _
        // Predicated region
        $region25: #{tpu_custom_call.1} parent=11 // pred_check
          %p328 = pneg %p131
        $region26: #{tpu_custom_call.1} parent=11 // pred_check_branch
          %330 = sbr.rel (%p328) target = $region28
        $region27: #{tpu_custom_call.1} parent=11 // pred_region
          _
        $region28: #{tpu_custom_call.1} parent=11 // pred_fallthru
          _
        // Predicated region
        $region29: #{tpu_custom_call.1} parent=11 // pred_check
          %p331 = pneg %p152
        $region30: #{tpu_custom_call.1} parent=11 // pred_check_branch
          %333 = sbr.rel (%p331) target = $region32
        $region31: #{tpu_custom_call.1} parent=11 // pred_region
          _
        $region32: #{tpu_custom_call.1} parent=11 // pred_fallthru
          _
        // Predicated region
        $region33: #{tpu_custom_call.1} parent=11 // pred_check
          %p334 = pneg %p173
        $region34: #{tpu_custom_call.1} parent=11 // pred_check_branch
          %336 = sbr.rel (%p334) target = $region36
        $region35: #{tpu_custom_call.1} parent=11 // pred_region
          _
        $region36: #{tpu_custom_call.1} parent=11 // pred_fallthru
          _
        // Predicated region
        $region37: #{tpu_custom_call.1} parent=11 // pred_check
          %p337 = pneg %p194
        $region38: #{tpu_custom_call.1} parent=11 // pred_check_branch
          %339 = sbr.rel (%p337) target = $region40
        $region39: #{tpu_custom_call.1} parent=11 // pred_region
          _
        $region40: #{tpu_custom_call.1} parent=11 // pred_fallthru
          _
        // Predicated region
        $region41: #{tpu_custom_call.1} parent=11 // pred_check
          %p340 = pneg %p215
        $region42: #{tpu_custom_call.1} parent=11 // pred_check_branch
          %342 = sbr.rel (%p340) target = $region44
        $region43: #{tpu_custom_call.1} parent=11 // pred_region
          _
        $region44: #{tpu_custom_call.1} parent=11 // pred_fallthru
          _
        // Predicated region
        $region45: #{tpu_custom_call.1} parent=11 // pred_check
          %p343 = pneg %p236
        $region46: #{tpu_custom_call.1} parent=11 // pred_check_branch
          %345 = sbr.rel (%p343) target = $region48
        $region47: #{tpu_custom_call.1} parent=11 // pred_region
          _
        $region48: #{tpu_custom_call.1} parent=11 // pred_fallthru
          _
        // Predicated region
        $region49: #{tpu_custom_call.1} parent=11 // pred_check
          %p346 = pneg %p257
        $region50: #{tpu_custom_call.1} parent=11 // pred_check_branch
          %348 = sbr.rel (%p346) target = $region52
        $region51: #{tpu_custom_call.1} parent=11 // pred_region
          _
        $region52: #{tpu_custom_call.1} parent=11 // pred_fallthru
          _
        // Predicated region
        $region53: #{tpu_custom_call.1} parent=11 // pred_check
          %p349 = pneg %p278
        $region54: #{tpu_custom_call.1} parent=11 // pred_check_branch
          %351 = sbr.rel (%p349) target = $region56
        $region55: #{tpu_custom_call.1} parent=11 // pred_region
          _
        $region56: #{tpu_custom_call.1} parent=11 // pred_fallthru
          _
      $region12: #{tpu_custom_call.1} parent=5 // pred_fallthru
        _
      %p352 = scmp.lt.s32.totalorder %s21, 2
      // Predicated region
      $region57: #{tpu_custom_call.1} parent=5 // pred_check
        %p353 = pneg %p352
      $region58: #{tpu_custom_call.1} parent=5 // pred_check_branch
        %355 = sbr.rel (%p353) target = $region60
      $region59: #{tpu_custom_call.1} parent=5 // pred_region
        // Predicated region
        $region61: #{tpu_custom_call.1} parent=59 // pred_check
          %p356 = pneg %p41
        $region62: #{tpu_custom_call.1} parent=59 // pred_check_branch
          %358 = sbr.rel (%p356) target = $region64
        $region63: #{tpu_custom_call.1} parent=59 // pred_region
          %p359 = scmp.lt.s32.totalorder %s21, 1
          %s360 = scalar_select %p359, %s21, 1
          %s361 = smul.addr %s360, 8
          %s362 = scalar_lea.vmem %s0, %s361
        $region64: #{tpu_custom_call.1} parent=59 // pred_fallthru
          _
      $region60: #{tpu_custom_call.1} parent=5 // pred_fallthru
        _
      %p363 = scmp.le.s32.totalorder 1, %s21
      %p364 = scmp.lt.s32.totalorder %s21, 3
      %p365 = pnand %p363, %p364
      %p366 = pneg %p365
      // Predicated region
      $region65: #{tpu_custom_call.1} parent=5 // pred_check
        _
      $region66: #{tpu_custom_call.1} parent=5 // pred_check_branch
        %368 = sbr.rel (%p365) target = $region68
      $region67: #{tpu_custom_call.1} parent=5 // pred_region
        %s369 = ssub.s32 %s21, 1
        %p370 = scmp.lt.s32.totalorder %s26, 1
        %s371 = scalar_select %p370, %s26, 1
        %s372 = smul.addr %s371, 8
        %s373 = scalar_lea.vmem %s0, %s372
        %p374 = pneg %p47
        %p375 = pneg %p44
        %p376 = pneg %p68
        %p377 = pneg %p65
        %p378 = pneg %p89
        %p379 = pneg %p86
        %p380 = pneg %p110
        %p381 = pneg %p107
        %p382 = pneg %p131
        %p383 = pneg %p128
        %p384 = pneg %p152
        %p385 = pneg %p149
        %p386 = pneg %p173
        %p387 = pneg %p170
        %p388 = pneg %p194
        %p389 = pneg %p191
        %p390 = pneg %p215
        %p391 = pneg %p212
        %p392 = pneg %p236
        %p393 = pneg %p233
        %p394 = pneg %p257
        %p395 = pneg %p254
        %p396 = pneg %p278
        %p397 = pneg %p275
        %p398 = pneg %p304
        %p399 = pneg %p301
        %s400 = sand.u32 %s291, 1
        %s401 = scalar_lea.sflag [#allocation3], %s400
        %s402 = sand.u32 %s291, 1
        %s403 = smul.addr %s402, 8
        %s404 = scalar_lea.vmem [#allocation2], %s403
        %p405 = scmp.lt.s32.totalorder %s26, 1
        %s406 = scalar_select %p405, %s26, 1
        %s407 = smul.addr %s406, 8
        %s408 = scalar_lea.vmem %s0, %s407
        %v410 = vld [vmem:[%s408] sm:$0xff]
        %v411 = vld [vmem:[%s1] sm:$0x1]
        %v412 = vld [vmem:[%s2] sm:$0x1]
        %vm413 = vcmask 261120
        %v414 = vsel %vm413, %v410, 0.0
        %415 = vadd.xlane.f32.xlu0 %v414
        %v416 = vpop.xlane.xlu0 %415
        %v417 = vrcp.pop 32.0
        %v418 = vmul.f32 %v416, %v417
        %v419 = vsub.f32 %v410, %v418
        %v420 = vmul.f32 %v419, %v419
        %v421 = vsel %vm413, %v420, 0.0
        %422 = vadd.xlane.f32.xlu0 %v421
        %v423 = vpop.xlane.xlu0 %422
        %v424 = vmul.f32 %v423, %v417
        %v425 = vadd.f32 %v424, 1e-05
        %v426 = vrsqrt.pop %v425
        %v427 = vmul.f32 %v419, %v426
        %v429 = vlaneseq
        %v430 = vshrl.u32 %v429, 7
        %v431 = vsub.s32 0, %v430
        %v432 = vrot.slane %v411, %v431
        %v434 = vmul.f32 %v427, %v432
        %v436 = vlaneseq
        %v437 = vshrl.u32 %v436, 7
        %v438 = vsub.s32 0, %v437
        %v439 = vrot.slane %v412, %v438
        %v441 = vadd.f32 %v434, %v439
        %v442 = vpack.c.bf16 %v441, %v441
        %v443 = vld [vmem:[%s3] sm:$0xf]
        %v444 = vld [vmem:[%s3 + $0x4] sm:$0xf]
        %v445 = vld [vmem:[%s3 + $0x8] sm:$0xf]
        %v446 = vld [vmem:[%s3 + $0xc] sm:$0xf]
        %v451 = vunpack.c.l.b16 %v443
        %v452 = vunpack.c.l.b16 %v444
        %v453 = vunpack.c.l.b16 %v445
        %v454 = vunpack.c.l.b16 %v446
        %v455 = vpack.c.b16 %v452, %v451
        %v456 = vpack.c.b16 %v454, %v453
        %v460 = vsel %vm413, %v442, 0
        %462 = vmatprep.subr.bf16.mxu0 0
        %463 = vmatpush1.bf16.msra.mxu0 %v455
        %464 = vmatprep.subr.bf16.mxu0 0
        %465 = vmatpush1.bf16.msra.mxu0 %v456
        %466 = vmatprep.subr.bf16.mxu0 0
        %467 = vmatpush1.bf16.msra.mxu0 0
        %468 = vmatprep.subr.bf16.mxu0 0
        %469 = vmatpush1.bf16.msra.mxu0 0
        %470 = vmatprep.subr.bf16.mxu0 0
        %471 = vmatpush1.bf16.msra.mxu0 0
        %472 = vmatprep.subr.bf16.mxu0 0
        %473 = vmatpush1.bf16.msra.mxu0 0
        %474 = vmatprep.subr.bf16.mxu0 0
        %475 = vmatpush1.bf16.msra.mxu0 0
        %476 = vmatprep.subr.bf16.mxu0 0
        %477 = vmatpush1.bf16.msra.mxu0 0
        %478 = vmatprep.subr.bf16.mxu0 0
        %479 = vmatpush1.bf16.msra.mxu0 0
        %480 = vmatprep.subr.bf16.mxu0 0
        %481 = vmatpush1.bf16.msra.mxu0 0
        %482 = vmatprep.subr.bf16.mxu0 0
        %483 = vmatpush1.bf16.msra.mxu0 0
        %484 = vmatprep.subr.bf16.mxu0 0
        %485 = vmatpush1.bf16.msra.mxu0 0
        %486 = vmatprep.subr.bf16.mxu0 0
        %487 = vmatpush1.bf16.msra.mxu0 0
        %488 = vmatprep.subr.bf16.mxu0 0
        %489 = vmatpush1.bf16.msra.mxu0 0
        %490 = vmatprep.subr.bf16.mxu0 0
        %491 = vmatpush1.bf16.msra.mxu0 0
        %492 = vmatprep.subr.bf16.mxu0 0
        %493 = vmatpush1.bf16.msra.mxu0 0
        %494 = vmatprep.mubr.bf16.mxu0 0
        %495 = vmatmul.mubr.bf16.gmra.mrb[0].mxu0 %v460
        %v496 = vpop.f32.mrb[0].mxu0
        %v497 = vadd.f32 0.0, %v496
        %v498 = vpop.f32.mrb[0].mxu0
        %v499 = vpop.f32.mrb[0].mxu0
        %v500 = vpop.f32.mrb[0].mxu0
        %501 = vdwg.mxu0
        %v502 = vmul.f32 %v497, 0.5
        %v503 = vpack.c.bf16 %v502, %v502
        %v504 = vpack.c.bf16 %v497, %v497
        %v505 = vlaneseq
        %v506 = vshrl.u32 %v505, 7
        %v507 = vlaneseq
        %v508 = vand.u32 %v507, 127
        %vm509 = vcmp.ge.s32.totalorder %v506, %v508
        %v510 = vld [vmem:[%s4] sm:$0xf]
        %v511 = vld [vmem:[%s4 + $0x4] sm:$0xf]
        %v512 = vld [vmem:[%s4 + $0x8] sm:$0xf]
        %v513 = vld [vmem:[%s4 + $0xc] sm:$0xf]
        %515 = vrot.lane.b32.xlu0 %v504, 96
        %v516 = vpop.permute.xlu0 %515
        %vm517 = vcmask 31744
        %v519 = vsel %vm517, %v503, 0
        %v522 = vsel %vm517, %v516, 0
        %524 = vmatprep.subr.bf16.mxu0 0
        %525 = vmatpush1.bf16.xpose.msra.mxu0 %v522
        %526 = vmatprep.subr.bf16.mxu0 0
        %527 = vmatpush1.bf16.xpose.msra.mxu0 0
        %528 = vmatprep.subr.bf16.mxu0 0
        %529 = vmatpush1.bf16.xpose.msra.mxu0 0
        %530 = vmatprep.subr.bf16.mxu0 0
        %531 = vmatpush1.bf16.xpose.msra.mxu0 0
        %532 = vmatprep.subr.bf16.mxu0 0
        %533 = vmatpush1.bf16.xpose.msra.mxu0 0
        %534 = vmatprep.subr.bf16.mxu0 0
        %535 = vmatpush1.bf16.xpose.msra.mxu0 0
        %536 = vmatprep.subr.bf16.mxu0 0
        %537 = vmatpush1.bf16.xpose.msra.mxu0 0
        %538 = vmatprep.subr.bf16.mxu0 0
        %539 = vmatpush1.bf16.xpose.msra.mxu0 0
        %540 = vmatprep.subr.bf16.mxu0 0
        %541 = vmatpush1.bf16.xpose.msra.mxu0 0
        %542 = vmatprep.subr.bf16.mxu0 0
        %543 = vmatpush1.bf16.xpose.msra.mxu0 0
        %544 = vmatprep.subr.bf16.mxu0 0
        %545 = vmatpush1.bf16.xpose.msra.mxu0 0
        %546 = vmatprep.subr.bf16.mxu0 0
        %547 = vmatpush1.bf16.xpose.msra.mxu0 0
        %548 = vmatprep.subr.bf16.mxu0 0
        %549 = vmatpush1.bf16.xpose.msra.mxu0 0
        %550 = vmatprep.subr.bf16.mxu0 0
        %551 = vmatpush1.bf16.xpose.msra.mxu0 0
        %552 = vmatprep.subr.bf16.mxu0 0
        %553 = vmatpush1.bf16.xpose.msra.mxu0 0
        %554 = vmatprep.subr.bf16.mxu0 0
        %555 = vmatpush1.bf16.xpose.msra.mxu0 0
        %556 = vmatprep.mubr.bf16.mxu0 0
        %557 = vmatmul.mubr.bf16.gmra.mrb[0].mxu0 %v519
        %v558 = vpop.f32.mrb[0].mxu0
        %v559 = vadd.f32 0.0, %v558
        %v560 = vpop.f32.mrb[0].mxu0
        %v561 = vpop.f32.mrb[0].mxu0
        %v562 = vpop.f32.mrb[0].mxu0
        %563 = vdwg.mxu0
        %v564 = vsel %vm509, %v559, -1e+30
        %vm565 = vcmask 64512
        %v566 = vsel %vm565, %v564, -inf
        %567 = vmax.xlane.f32.xlu0 %v566
        %v568 = vpop.xlane.xlu0 %567
        %v569 = vsub.f32 %v564, %v568
        %v570 = vmul.f32 %v569, 1.442695
        %v571 = vpow.pop %v570
        %v572 = vsel %vm565, %v571, 0.0
        %573 = vadd.xlane.f32.xlu0 %v572
        %v574 = vpop.xlane.xlu0 %573
        %v575 = vrcp.pop %v574
        %v576 = vmul.f32 %v571, %v575
        %v577 = vpack.c.bf16 %v576, %v576
        %578 = vrot.lane.b32.xlu0 %v504, 64
        %v579 = vpop.permute.xlu0 %578
        %v581 = vsel %vm565, %v577, 0
        %vm583 = vcmask 1043456
        %v585 = vsel %vm583, %v579, 0
        %587 = vmatprep.subr.bf16.mxu0 0
        %588 = vmatpush1.bf16.msra.mxu0 %v585
        %589 = vmatprep.subr.bf16.mxu0 0
        %590 = vmatpush1.bf16.msra.mxu0 0
        %591 = vmatprep.subr.bf16.mxu0 0
        %592 = vmatpush1.bf16.msra.mxu0 0
        %593 = vmatprep.subr.bf16.mxu0 0
        %594 = vmatpush1.bf16.msra.mxu0 0
        %595 = vmatprep.subr.bf16.mxu0 0
        %596 = vmatpush1.bf16.msra.mxu0 0
        %597 = vmatprep.subr.bf16.mxu0 0
        %598 = vmatpush1.bf16.msra.mxu0 0
        %599 = vmatprep.subr.bf16.mxu0 0
        %600 = vmatpush1.bf16.msra.mxu0 0
        %601 = vmatprep.subr.bf16.mxu0 0
        %602 = vmatpush1.bf16.msra.mxu0 0
        %603 = vmatprep.subr.bf16.mxu0 0
        %604 = vmatpush1.bf16.msra.mxu0 0
        %605 = vmatprep.subr.bf16.mxu0 0
        %606 = vmatpush1.bf16.msra.mxu0 0
        %607 = vmatprep.subr.bf16.mxu0 0
        %608 = vmatpush1.bf16.msra.mxu0 0
        %609 = vmatprep.subr.bf16.mxu0 0
        %610 = vmatpush1.bf16.msra.mxu0 0
        %611 = vmatprep.subr.bf16.mxu0 0
        %612 = vmatpush1.bf16.msra.mxu0 0
        %613 = vmatprep.subr.bf16.mxu0 0
        %614 = vmatpush1.bf16.msra.mxu0 0
        %615 = vmatprep.subr.bf16.mxu0 0
        %616 = vmatpush1.bf16.msra.mxu0 0
        %617 = vmatprep.subr.bf16.mxu0 0
        %618 = vmatpush1.bf16.msra.mxu0 0
        %619 = vmatprep.mubr.bf16.mxu0 0
        %620 = vmatmul.mubr.bf16.gmra.mrb[0].mxu0 %v581
        %v621 = vpop.f32.mrb[0].mxu0
        %v622 = vadd.f32 0.0, %v621
        %v623 = vpop.f32.mrb[0].mxu0
        %v624 = vpop.f32.mrb[0].mxu0
        %v625 = vpop.f32.mrb[0].mxu0
        %626 = vdwg.mxu0
        %v627 = vpack.c.bf16 %v622, %v622
        %629 = vrot.lane.b32.xlu0 %v503, 124
        %v630 = vpop.permute.xlu0 %629
        %631 = vrot.lane.b32.xlu0 %v504, 92
        %v632 = vpop.permute.xlu0 %631
        %v634 = vsel %vm517, %v630, 0
        %v637 = vsel %vm517, %v632, 0
        %639 = vmatprep.subr.bf16.mxu0 0
        %640 = vmatpush1.bf16.xpose.msra.mxu0 %v637
        %641 = vmatprep.subr.bf16.mxu0 0
        %642 = vmatpush1.bf16.xpose.msra.mxu0 0
        %643 = vmatprep.subr.bf16.mxu0 0
        %644 = vmatpush1.bf16.xpose.msra.mxu0 0
        %645 = vmatprep.subr.bf16.mxu0 0
        %646 = vmatpush1.bf16.xpose.msra.mxu0 0
        %647 = vmatprep.subr.bf16.mxu0 0
        %648 = vmatpush1.bf16.xpose.msra.mxu0 0
        %649 = vmatprep.subr.bf16.mxu0 0
        %650 = vmatpush1.bf16.xpose.msra.mxu0 0
        %651 = vmatprep.subr.bf16.mxu0 0
        %652 = vmatpush1.bf16.xpose.msra.mxu0 0
        %653 = vmatprep.subr.bf16.mxu0 0
        %654 = vmatpush1.bf16.xpose.msra.mxu0 0
        %655 = vmatprep.subr.bf16.mxu0 0
        %656 = vmatpush1.bf16.xpose.msra.mxu0 0
        %657 = vmatprep.subr.bf16.mxu0 0
        %658 = vmatpush1.bf16.xpose.msra.mxu0 0
        %659 = vmatprep.subr.bf16.mxu0 0
        %660 = vmatpush1.bf16.xpose.msra.mxu0 0
        %661 = vmatprep.subr.bf16.mxu0 0
        %662 = vmatpush1.bf16.xpose.msra.mxu0 0
        %663 = vmatprep.subr.bf16.mxu0 0
        %664 = vmatpush1.bf16.xpose.msra.mxu0 0
        %665 = vmatprep.subr.bf16.mxu0 0
        %666 = vmatpush1.bf16.xpose.msra.mxu0 0
        %667 = vmatprep.subr.bf16.mxu0 0
        %668 = vmatpush1.bf16.xpose.msra.mxu0 0
        %669 = vmatprep.subr.bf16.mxu0 0
        %670 = vmatpush1.bf16.xpose.msra.mxu0 0
        %671 = vmatprep.mubr.bf16.mxu0 0
        %672 = vmatmul.mubr.bf16.gmra.mrb[0].mxu0 %v634
        %v673 = vpop.f32.mrb[0].mxu0
        %v674 = vadd.f32 0.0, %v673
        %v675 = vpop.f32.mrb[0].mxu0
        %v676 = vpop.f32.mrb[0].mxu0
        %v677 = vpop.f32.mrb[0].mxu0
        %678 = vdwg.mxu0
        %v679 = vsel %vm509, %v674, -1e+30
        %v680 = vsel %vm565, %v679, -inf
        %681 = vmax.xlane.f32.xlu0 %v680
        %v682 = vpop.xlane.xlu0 %681
        %v683 = vsub.f32 %v679, %v682
        %v684 = vmul.f32 %v683, 1.442695
        %v685 = vpow.pop %v684
        %v686 = vsel %vm565, %v685, 0.0
        %687 = vadd.xlane.f32.xlu0 %v686
        %v688 = vpop.xlane.xlu0 %687
        %v689 = vrcp.pop %v688
        %v690 = vmul.f32 %v685, %v689
        %v691 = vpack.c.bf16 %v690, %v690
        %692 = vrot.lane.b32.xlu0 %v504, 60
        %v693 = vpop.permute.xlu0 %692
        %v695 = vsel %vm565, %v691, 0
        %v698 = vsel %vm583, %v693, 0
        %700 = vmatprep.subr.bf16.mxu0 0
        %701 = vmatpush1.bf16.msra.mxu0 %v698
        %702 = vmatprep.subr.bf16.mxu0 0
        %703 = vmatpush1.bf16.msra.mxu0 0
        %704 = vmatprep.subr.bf16.mxu0 0
        %705 = vmatpush1.bf16.msra.mxu0 0
        %706 = vmatprep.subr.bf16.mxu0 0
        %707 = vmatpush1.bf16.msra.mxu0 0
        %708 = vmatprep.subr.bf16.mxu0 0
        %709 = vmatpush1.bf16.msra.mxu0 0
        %710 = vmatprep.subr.bf16.mxu0 0
        %711 = vmatpush1.bf16.msra.mxu0 0
        %712 = vmatprep.subr.bf16.mxu0 0
        %713 = vmatpush1.bf16.msra.mxu0 0
        %714 = vmatprep.subr.bf16.mxu0 0
        %715 = vmatpush1.bf16.msra.mxu0 0
        %716 = vmatprep.subr.bf16.mxu0 0
        %717 = vmatpush1.bf16.msra.mxu0 0
        %718 = vmatprep.subr.bf16.mxu0 0
        %719 = vmatpush1.bf16.msra.mxu0 0
        %720 = vmatprep.subr.bf16.mxu0 0
        %721 = vmatpush1.bf16.msra.mxu0 0
        %722 = vmatprep.subr.bf16.mxu0 0
        %723 = vmatpush1.bf16.msra.mxu0 0
        %724 = vmatprep.subr.bf16.mxu0 0
        %725 = vmatpush1.bf16.msra.mxu0 0
        %726 = vmatprep.subr.bf16.mxu0 0
        %727 = vmatpush1.bf16.msra.mxu0 0
        %728 = vmatprep.subr.bf16.mxu0 0
        %729 = vmatpush1.bf16.msra.mxu0 0
        %730 = vmatprep.subr.bf16.mxu0 0
        %731 = vmatpush1.bf16.msra.mxu0 0
        %732 = vmatprep.mubr.bf16.mxu0 0
        %733 = vmatmul.mubr.bf16.gmra.mrb[0].mxu0 %v695
        %v734 = vpop.f32.mrb[0].mxu0
        %v735 = vadd.f32 0.0, %v734
        %v736 = vpop.f32.mrb[0].mxu0
        %v737 = vpop.f32.mrb[0].mxu0
        %v738 = vpop.f32.mrb[0].mxu0
        %739 = vdwg.mxu0
        %v740 = vpack.c.bf16 %v735, %v735
        %v742 = vunpack.c.l.b16 %v510
        %v743 = vpack.c.b16 %v742, %v742
        %v744 = vrot.slane %v743, 2
        %v746 = vsel %vm517, %v740, 0
        %vm748 = vcmask 1041408
        %v750 = vsel %vm748, %v744, 0
        %752 = vmatprep.subr.bf16.mxu0 0
        %753 = vmatpush1.bf16.msra.mxu0 %v750
        %754 = vmatprep.subr.bf16.mxu0 0
        %755 = vmatpush1.bf16.msra.mxu0 0
        %756 = vmatprep.subr.bf16.mxu0 0
        %757 = vmatpush1.bf16.msra.mxu0 0
        %758 = vmatprep.subr.bf16.mxu0 0
        %759 = vmatpush1.bf16.msra.mxu0 0
        %760 = vmatprep.subr.bf16.mxu0 0
        %761 = vmatpush1.bf16.msra.mxu0 0
        %762 = vmatprep.subr.bf16.mxu0 0
        %763 = vmatpush1.bf16.msra.mxu0 0
        %764 = vmatprep.subr.bf16.mxu0 0
        %765 = vmatpush1.bf16.msra.mxu0 0
        %766 = vmatprep.subr.bf16.mxu0 0
        %767 = vmatpush1.bf16.msra.mxu0 0
        %768 = vmatprep.subr.bf16.mxu0 0
        %769 = vmatpush1.bf16.msra.mxu0 0
        %770 = vmatprep.subr.bf16.mxu0 0
        %771 = vmatpush1.bf16.msra.mxu0 0
        %772 = vmatprep.subr.bf16.mxu0 0
        %773 = vmatpush1.bf16.msra.mxu0 0
        %774 = vmatprep.subr.bf16.mxu0 0
        %775 = vmatpush1.bf16.msra.mxu0 0
        %776 = vmatprep.subr.bf16.mxu0 0
        %777 = vmatpush1.bf16.msra.mxu0 0
        %778 = vmatprep.subr.bf16.mxu0 0
        %779 = vmatpush1.bf16.msra.mxu0 0
        %780 = vmatprep.subr.bf16.mxu0 0
        %781 = vmatpush1.bf16.msra.mxu0 0
        %782 = vmatprep.subr.bf16.mxu0 0
        %783 = vmatpush1.bf16.msra.mxu0 0
        %784 = vmatprep.mubr.bf16.mxu0 0
        %785 = vmatmul.mubr.bf16.gmra.mrb[0].mxu0 %v746
        %v786 = vpop.f32.mrb[0].mxu0
        %v787 = vadd.f32 0.0, %v786
        %v788 = vpop.f32.mrb[0].mxu0
        %v789 = vpop.f32.mrb[0].mxu0
        %v790 = vpop.f32.mrb[0].mxu0
        %791 = vdwg.mxu0
        %v793 = vsel %vm517, %v627, 0
        %v796 = vsel %vm748, %v510, 0
        %798 = vmatprep.subr.bf16.mxu0 0
        %799 = vmatpush1.bf16.msra.mxu0 %v796
        %800 = vmatprep.subr.bf16.mxu0 0
        %801 = vmatpush1.bf16.msra.mxu0 0
        %802 = vmatprep.subr.bf16.mxu0 0
        %803 = vmatpush1.bf16.msra.mxu0 0
        %804 = vmatprep.subr.bf16.mxu0 0
        %805 = vmatpush1.bf16.msra.mxu0 0
        %806 = vmatprep.subr.bf16.mxu0 0
        %807 = vmatpush1.bf16.msra.mxu0 0
        %808 = vmatprep.subr.bf16.mxu0 0
        %809 = vmatpush1.bf16.msra.mxu0 0
        %810 = vmatprep.subr.bf16.mxu0 0
        %811 = vmatpush1.bf16.msra.mxu0 0
        %812 = vmatprep.subr.bf16.mxu0 0
        %813 = vmatpush1.bf16.msra.mxu0 0
        %814 = vmatprep.subr.bf16.mxu0 0
        %815 = vmatpush1.bf16.msra.mxu0 0
        %816 = vmatprep.subr.bf16.mxu0 0
        %817 = vmatpush1.bf16.msra.mxu0 0
        %818 = vmatprep.subr.bf16.mxu0 0
        %819 = vmatpush1.bf16.msra.mxu0 0
        %820 = vmatprep.subr.bf16.mxu0 0
        %821 = vmatpush1.bf16.msra.mxu0 0
        %822 = vmatprep.subr.bf16.mxu0 0
        %823 = vmatpush1.bf16.msra.mxu0 0
        %824 = vmatprep.subr.bf16.mxu0 0
        %825 = vmatpush1.bf16.msra.mxu0 0
        %826 = vmatprep.subr.bf16.mxu0 0
        %827 = vmatpush1.bf16.msra.mxu0 0
        %828 = vmatprep.subr.bf16.mxu0 0
        %829 = vmatpush1.bf16.msra.mxu0 0
        %830 = vmatprep.mubr.bf16.mxu0 0
        %831 = vmatmul.mubr.bf16.gmra.mrb[0].mxu0 %v793
        %v832 = vpop.f32.mrb[0].mxu0
        %v833 = vadd.f32 %v787, %v832
        %v834 = vpop.f32.mrb[0].mxu0
        %v835 = vpop.f32.mrb[0].mxu0
        %v836 = vpop.f32.mrb[0].mxu0
        %837 = vdwg.mxu0
        %838 = vrot.lane.b32.xlu0 %v503, 120
        %v839 = vpop.permute.xlu0 %838
        %840 = vrot.lane.b32.xlu0 %v504, 88
        %v841 = vpop.permute.xlu0 %840
        %v843 = vsel %vm517, %v839, 0
        %v846 = vsel %vm517, %v841, 0
        %848 = vmatprep.subr.bf16.mxu0 0
        %849 = vmatpush1.bf16.xpose.msra.mxu0 %v846
        %850 = vmatprep.subr.bf16.mxu0 0
        %851 = vmatpush1.bf16.xpose.msra.mxu0 0
        %852 = vmatprep.subr.bf16.mxu0 0
        %853 = vmatpush1.bf16.xpose.msra.mxu0 0
        %854 = vmatprep.subr.bf16.mxu0 0
        %855 = vmatpush1.bf16.xpose.msra.mxu0 0
        %856 = vmatprep.subr.bf16.mxu0 0
        %857 = vmatpush1.bf16.xpose.msra.mxu0 0
        %858 = vmatprep.subr.bf16.mxu0 0
        %859 = vmatpush1.bf16.xpose.msra.mxu0 0
        %860 = vmatprep.subr.bf16.mxu0 0
        %861 = vmatpush1.bf16.xpose.msra.mxu0 0
        %862 = vmatprep.subr.bf16.mxu0 0
        %863 = vmatpush1.bf16.xpose.msra.mxu0 0
        %864 = vmatprep.subr.bf16.mxu0 0
        %865 = vmatpush1.bf16.xpose.msra.mxu0 0
        %866 = vmatprep.subr.bf16.mxu0 0
        %867 = vmatpush1.bf16.xpose.msra.mxu0 0
        %868 = vmatprep.subr.bf16.mxu0 0
        %869 = vmatpush1.bf16.xpose.msra.mxu0 0
        %870 = vmatprep.subr.bf16.mxu0 0
        %871 = vmatpush1.bf16.xpose.msra.mxu0 0
        %872 = vmatprep.subr.bf16.mxu0 0
        %873 = vmatpush1.bf16.xpose.msra.mxu0 0
        %874 = vmatprep.subr.bf16.mxu0 0
        %875 = vmatpush1.bf16.xpose.msra.mxu0 0
        %876 = vmatprep.subr.bf16.mxu0 0
        %877 = vmatpush1.bf16.xpose.msra.mxu0 0
        %878 = vmatprep.subr.bf16.mxu0 0
        %879 = vmatpush1.bf16.xpose.msra.mxu0 0
        %880 = vmatprep.mubr.bf16.mxu0 0
        %881 = vmatmul.mubr.bf16.gmra.mrb[0].mxu0 %v843
        %v882 = vpop.f32.mrb[0].mxu0
        %v883 = vadd.f32 0.0, %v882
        %v884 = vpop.f32.mrb[0].mxu0
        %v885 = vpop.f32.mrb[0].mxu0
        %v886 = vpop.f32.mrb[0].mxu0
        %887 = vdwg.mxu0
        %v888 = vsel %vm509, %v883, -1e+30
        %v889 = vsel %vm565, %v888, -inf
        %890 = vmax.xlane.f32.xlu0 %v889
        %v891 = vpop.xlane.xlu0 %890
        %v892 = vsub.f32 %v888, %v891
        %v893 = vmul.f32 %v892, 1.442695
        %v894 = vpow.pop %v893
        %v895 = vsel %vm565, %v894, 0.0
        %896 = vadd.xlane.f32.xlu0 %v895
        %v897 = vpop.xlane.xlu0 %896
        %v898 = vrcp.pop %v897
        %v899 = vmul.f32 %v894, %v898
        %v900 = vpack.c.bf16 %v899, %v899
        %901 = vrot.lane.b32.xlu0 %v504, 56
        %v902 = vpop.permute.xlu0 %901
        %v904 = vsel %vm565, %v900, 0
        %v907 = vsel %vm583, %v902, 0
        %909 = vmatprep.subr.bf16.mxu0 0
        %910 = vmatpush1.bf16.msra.mxu0 %v907
        %911 = vmatprep.subr.bf16.mxu0 0
        %912 = vmatpush1.bf16.msra.mxu0 0
        %913 = vmatprep.subr.bf16.mxu0 0
        %914 = vmatpush1.bf16.msra.mxu0 0
        %915 = vmatprep.subr.bf16.mxu0 0
        %916 = vmatpush1.bf16.msra.mxu0 0
        %917 = vmatprep.subr.bf16.mxu0 0
        %918 = vmatpush1.bf16.msra.mxu0 0
        %919 = vmatprep.subr.bf16.mxu0 0
        %920 = vmatpush1.bf16.msra.mxu0 0
        %921 = vmatprep.subr.bf16.mxu0 0
        %922 = vmatpush1.bf16.msra.mxu0 0
        %923 = vmatprep.subr.bf16.mxu0 0
        %924 = vmatpush1.bf16.msra.mxu0 0
        %925 = vmatprep.subr.bf16.mxu0 0
        %926 = vmatpush1.bf16.msra.mxu0 0
        %927 = vmatprep.subr.bf16.mxu0 0
        %928 = vmatpush1.bf16.msra.mxu0 0
        %929 = vmatprep.subr.bf16.mxu0 0
        %930 = vmatpush1.bf16.msra.mxu0 0
        %931 = vmatprep.subr.bf16.mxu0 0
        %932 = vmatpush1.bf16.msra.mxu0 0
        %933 = vmatprep.subr.bf16.mxu0 0
        %934 = vmatpush1.bf16.msra.mxu0 0
        %935 = vmatprep.subr.bf16.mxu0 0
        %936 = vmatpush1.bf16.msra.mxu0 0
        %937 = vmatprep.subr.bf16.mxu0 0
        %938 = vmatpush1.bf16.msra.mxu0 0
        %939 = vmatprep.subr.bf16.mxu0 0
        %940 = vmatpush1.bf16.msra.mxu0 0
        %941 = vmatprep.mubr.bf16.mxu0 0
        %942 = vmatmul.mubr.bf16.gmra.mrb[0].mxu0 %v904
        %v943 = vpop.f32.mrb[0].mxu0
        %v944 = vadd.f32 0.0, %v943
        %v945 = vpop.f32.mrb[0].mxu0
        %v946 = vpop.f32.mrb[0].mxu0
        %v947 = vpop.f32.mrb[0].mxu0
        %948 = vdwg.mxu0
        %v949 = vpack.c.bf16 %v944, %v944
        %v951 = vsel %vm517, %v949, 0
        %v954 = vsel %vm748, %v511, 0
        %956 = vmatprep.subr.bf16.mxu0 0
        %957 = vmatpush1.bf16.msra.mxu0 %v954
        %958 = vmatprep.subr.bf16.mxu0 0
        %959 = vmatpush1.bf16.msra.mxu0 0
        %960 = vmatprep.subr.bf16.mxu0 0
        %961 = vmatpush1.bf16.msra.mxu0 0
        %962 = vmatprep.subr.bf16.mxu0 0
        %963 = vmatpush1.bf16.msra.mxu0 0
        %964 = vmatprep.subr.bf16.mxu0 0
        %965 = vmatpush1.bf16.msra.mxu0 0
        %966 = vmatprep.subr.bf16.mxu0 0
        %967 = vmatpush1.bf16.msra.mxu0 0
        %968 = vmatprep.subr.bf16.mxu0 0
        %969 = vmatpush1.bf16.msra.mxu0 0
        %970 = vmatprep.subr.bf16.mxu0 0
        %971 = vmatpush1.bf16.msra.mxu0 0
        %972 = vmatprep.subr.bf16.mxu0 0
        %973 = vmatpush1.bf16.msra.mxu0 0
        %974 = vmatprep.subr.bf16.mxu0 0
        %975 = vmatpush1.bf16.msra.mxu0 0
        %976 = vmatprep.subr.bf16.mxu0 0
        %977 = vmatpush1.bf16.msra.mxu0 0
        %978 = vmatprep.subr.bf16.mxu0 0
        %979 = vmatpush1.bf16.msra.mxu0 0
        %980 = vmatprep.subr.bf16.mxu0 0
        %981 = vmatpush1.bf16.msra.mxu0 0
        %982 = vmatprep.subr.bf16.mxu0 0
        %983 = vmatpush1.bf16.msra.mxu0 0
        %984 = vmatprep.subr.bf16.mxu0 0
        %985 = vmatpush1.bf16.msra.mxu0 0
        %986 = vmatprep.subr.bf16.mxu0 0
        %987 = vmatpush1.bf16.msra.mxu0 0
        %988 = vmatprep.mubr.bf16.mxu0 0
        %989 = vmatmul.mubr.bf16.gmra.mrb[0].mxu0 %v951
        %v990 = vpop.f32.mrb[0].mxu0
        %v991 = vadd.f32 0.0, %v990
        %v992 = vpop.f32.mrb[0].mxu0
        %v993 = vpop.f32.mrb[0].mxu0
        %v994 = vpop.f32.mrb[0].mxu0
        %995 = vdwg.mxu0
        %v996 = vadd.f32 %v833, %v991
        %997 = vrot.lane.b32.xlu0 %v503, 116
        %v998 = vpop.permute.xlu0 %997
        %999 = vrot.lane.b32.xlu0 %v504, 84
        %v1000 = vpop.permute.xlu0 %999
        %v1002 = vsel %vm517, %v998, 0
        %v1005 = vsel %vm517, %v1000, 0
        %1007 = vmatprep.subr.bf16.mxu0 0
        %1008 = vmatpush1.bf16.xpose.msra.mxu0 %v1005
        %1009 = vmatprep.subr.bf16.mxu0 0
        %1010 = vmatpush1.bf16.xpose.msra.mxu0 0
        %1011 = vmatprep.subr.bf16.mxu0 0
        %1012 = vmatpush1.bf16.xpose.msra.mxu0 0
        %1013 = vmatprep.subr.bf16.mxu0 0
        %1014 = vmatpush1.bf16.xpose.msra.mxu0 0
        %1015 = vmatprep.subr.bf16.mxu0 0
        %1016 = vmatpush1.bf16.xpose.msra.mxu0 0
        %1017 = vmatprep.subr.bf16.mxu0 0
        %1018 = vmatpush1.bf16.xpose.msra.mxu0 0
        %1019 = vmatprep.subr.bf16.mxu0 0
        %1020 = vmatpush1.bf16.xpose.msra.mxu0 0
        %1021 = vmatprep.subr.bf16.mxu0 0
        %1022 = vmatpush1.bf16.xpose.msra.mxu0 0
        %1023 = vmatprep.subr.bf16.mxu0 0
        %1024 = vmatpush1.bf16.xpose.msra.mxu0 0
        %1025 = vmatprep.subr.bf16.mxu0 0
        %1026 = vmatpush1.bf16.xpose.msra.mxu0 0
        %1027 = vmatprep.subr.bf16.mxu0 0
        %1028 = vmatpush1.bf16.xpose.msra.mxu0 0
        %1029 = vmatprep.subr.bf16.mxu0 0
        %1030 = vmatpush1.bf16.xpose.msra.mxu0 0
        %1031 = vmatprep.subr.bf16.mxu0 0
        %1032 = vmatpush1.bf16.xpose.msra.mxu0 0
        %1033 = vmatprep.subr.bf16.mxu0 0
        %1034 = vmatpush1.bf16.xpose.msra.mxu0 0
        %1035 = vmatprep.subr.bf16.mxu0 0
        %1036 = vmatpush1.bf16.xpose.msra.mxu0 0
        %1037 = vmatprep.subr.bf16.mxu0 0
        %1038 = vmatpush1.bf16.xpose.msra.mxu0 0
        %1039 = vmatprep.mubr.bf16.mxu0 0
        %1040 = vmatmul.mubr.bf16.gmra.mrb[0].mxu0 %v1002
        %v1041 = vpop.f32.mrb[0].mxu0
        %v1042 = vadd.f32 0.0, %v1041
        %v1043 = vpop.f32.mrb[0].mxu0
        %v1044 = vpop.f32.mrb[0].mxu0
        %v1045 = vpop.f32.mrb[0].mxu0
        %1046 = vdwg.mxu0
        %v1047 = vsel %vm509, %v1042, -1e+30
        %v1048 = vsel %vm565, %v1047, -inf
        %1049 = vmax.xlane.f32.xlu0 %v1048
        %v1050 = vpop.xlane.xlu0 %1049
        %v1051 = vsub.f32 %v1047, %v1050
        %v1052 = vmul.f32 %v1051, 1.442695
        %v1053 = vpow.pop %v1052
        %v1054 = vsel %vm565, %v1053, 0.0
        %1055 = vadd.xlane.f32.xlu0 %v1054
        %v1056 = vpop.xlane.xlu0 %1055
        %v1057 = vrcp.pop %v1056
        %v1058 = vmul.f32 %v1053, %v1057
        %v1059 = vpack.c.bf16 %v1058, %v1058
        %1060 = vrot.lane.b32.xlu0 %v504, 52
        %v1061 = vpop.permute.xlu0 %1060
        %v1063 = vsel %vm565, %v1059, 0
        %v1066 = vsel %vm583, %v1061, 0
        %1068 = vmatprep.subr.bf16.mxu0 0
        %1069 = vmatpush1.bf16.msra.mxu0 %v1066
        %1070 = vmatprep.subr.bf16.mxu0 0
        %1071 = vmatpush1.bf16.msra.mxu0 0
        %1072 = vmatprep.subr.bf16.mxu0 0
        %1073 = vmatpush1.bf16.msra.mxu0 0
        %1074 = vmatprep.subr.bf16.mxu0 0
        %1075 = vmatpush1.bf16.msra.mxu0 0
        %1076 = vmatprep.subr.bf16.mxu0 0
        %1077 = vmatpush1.bf16.msra.mxu0 0
        %1078 = vmatprep.subr.bf16.mxu0 0
        %1079 = vmatpush1.bf16.msra.mxu0 0
        %1080 = vmatprep.subr.bf16.mxu0 0
        %1081 = vmatpush1.bf16.msra.mxu0 0
        %1082 = vmatprep.subr.bf16.mxu0 0
        %1083 = vmatpush1.bf16.msra.mxu0 0
        %1084 = vmatprep.subr.bf16.mxu0 0
        %1085 = vmatpush1.bf16.msra.mxu0 0
        %1086 = vmatprep.subr.bf16.mxu0 0
        %1087 = vmatpush1.bf16.msra.mxu0 0
        %1088 = vmatprep.subr.bf16.mxu0 0
        %1089 = vmatpush1.bf16.msra.mxu0 0
        %1090 = vmatprep.subr.bf16.mxu0 0
        %1091 = vmatpush1.bf16.msra.mxu0 0
        %1092 = vmatprep.subr.bf16.mxu0 0
        %1093 = vmatpush1.bf16.msra.mxu0 0
        %1094 = vmatprep.subr.bf16.mxu0 0
        %1095 = vmatpush1.bf16.msra.mxu0 0
        %1096 = vmatprep.subr.bf16.mxu0 0
        %1097 = vmatpush1.bf16.msra.mxu0 0
        %1098 = vmatprep.subr.bf16.mxu0 0
        %1099 = vmatpush1.bf16.msra.mxu0 0
        %1100 = vmatprep.mubr.bf16.mxu0 0
        %1101 = vmatmul.mubr.bf16.gmra.mrb[0].mxu0 %v1063
        %v1102 = vpop.f32.mrb[0].mxu0
        %v1103 = vadd.f32 0.0, %v1102
        %v1104 = vpop.f32.mrb[0].mxu0
        %v1105 = vpop.f32.mrb[0].mxu0
        %v1106 = vpop.f32.mrb[0].mxu0
        %1107 = vdwg.mxu0
        %v1108 = vpack.c.bf16 %v1103, %v1103
        %v1110 = vunpack.c.l.b16 %v511
        %v1111 = vpack.c.b16 %v1110, %v1110
        %v1112 = vrot.slane %v1111, 2
        %v1114 = vsel %vm517, %v1108, 0
        %v1117 = vsel %vm748, %v1112, 0
        %1119 = vmatprep.subr.bf16.mxu0 0
        %1120 = vmatpush1.bf16.msra.mxu0 %v1117
        %1121 = vmatprep.subr.bf16.mxu0 0
        %1122 = vmatpush1.bf16.msra.mxu0 0
        %1123 = vmatprep.subr.bf16.mxu0 0
        %1124 = vmatpush1.bf16.msra.mxu0 0
        %1125 = vmatprep.subr.bf16.mxu0 0
        %1126 = vmatpush1.bf16.msra.mxu0 0
        %1127 = vmatprep.subr.bf16.mxu0 0
        %1128 = vmatpush1.bf16.msra.mxu0 0
        %1129 = vmatprep.subr.bf16.mxu0 0
        %1130 = vmatpush1.bf16.msra.mxu0 0
        %1131 = vmatprep.subr.bf16.mxu0 0
        %1132 = vmatpush1.bf16.msra.mxu0 0
        %1133 = vmatprep.subr.bf16.mxu0 0
        %1134 = vmatpush1.bf16.msra.mxu0 0
        %1135 = vmatprep.subr.bf16.mxu0 0
        %1136 = vmatpush1.bf16.msra.mxu0 0
        %1137 = vmatprep.subr.bf16.mxu0 0
        %1138 = vmatpush1.bf16.msra.mxu0 0
        %1139 = vmatprep.subr.bf16.mxu0 0
        %1140 = vmatpush1.bf16.msra.mxu0 0
        %1141 = vmatprep.subr.bf16.mxu0 0
        %1142 = vmatpush1.bf16.msra.mxu0 0
        %1143 = vmatprep.subr.bf16.mxu0 0
        %1144 = vmatpush1.bf16.msra.mxu0 0
        %1145 = vmatprep.subr.bf16.mxu0 0
        %1146 = vmatpush1.bf16.msra.mxu0 0
        %1147 = vmatprep.subr.bf16.mxu0 0
        %1148 = vmatpush1.bf16.msra.mxu0 0
        %1149 = vmatprep.subr.bf16.mxu0 0
        %1150 = vmatpush1.bf16.msra.mxu0 0
        %1151 = vmatprep.mubr.bf16.mxu0 0
        %1152 = vmatmul.mubr.bf16.gmra.mrb[0].mxu0 %v1114
        %v1153 = vpop.f32.mrb[0].mxu0
        %v1154 = vadd.f32 0.0, %v1153
        %v1155 = vpop.f32.mrb[0].mxu0
        %v1156 = vpop.f32.mrb[0].mxu0
        %v1157 = vpop.f32.mrb[0].mxu0
        %1158 = vdwg.mxu0
        %v1159 = vadd.f32 %v996, %v1154
        %1160 = vrot.lane.b32.xlu0 %v503, 112
        %v1161 = vpop.permute.xlu0 %1160
        %1162 = vrot.lane.b32.xlu0 %v504, 80
        %v1163 = vpop.permute.xlu0 %1162
        %v1165 = vsel %vm517, %v1161, 0
        %v1168 = vsel %vm517, %v1163, 0
        %1170 = vmatprep.subr.bf16.mxu0 0
        %1171 = vmatpush1.bf16.xpose.msra.mxu0 %v1168
        %1172 = vmatprep.subr.bf16.mxu0 0
        %1173 = vmatpush1.bf16.xpose.msra.mxu0 0
        %1174 = vmatprep.subr.bf16.mxu0 0
        %1175 = vmatpush1.bf16.xpose.msra.mxu0 0
        %1176 = vmatprep.subr.bf16.mxu0 0
        %1177 = vmatpush1.bf16.xpose.msra.mxu0 0
        %1178 = vmatprep.subr.bf16.mxu0 0
        %1179 = vmatpush1.bf16.xpose.msra.mxu0 0
        %1180 = vmatprep.subr.bf16.mxu0 0
        %1181 = vmatpush1.bf16.xpose.msra.mxu0 0
        %1182 = vmatprep.subr.bf16.mxu0 0
        %1183 = vmatpush1.bf16.xpose.msra.mxu0 0
        %1184 = vmatprep.subr.bf16.mxu0 0
        %1185 = vmatpush1.bf16.xpose.msra.mxu0 0
        %1186 = vmatprep.subr.bf16.mxu0 0
        %1187 = vmatpush1.bf16.xpose.msra.mxu0 0
        %1188 = vmatprep.subr.bf16.mxu0 0
        %1189 = vmatpush1.bf16.xpose.msra.mxu0 0
        %1190 = vmatprep.subr.bf16.mxu0 0
        %1191 = vmatpush1.bf16.xpose.msra.mxu0 0
        %1192 = vmatprep.subr.bf16.mxu0 0
        %1193 = vmatpush1.bf16.xpose.msra.mxu0 0
        %1194 = vmatprep.subr.bf16.mxu0 0
        %1195 = vmatpush1.bf16.xpose.msra.mxu0 0
        %1196 = vmatprep.subr.bf16.mxu0 0
        %1197 = vmatpush1.bf16.xpose.msra.mxu0 0
        %1198 = vmatprep.subr.bf16.mxu0 0
        %1199 = vmatpush1.bf16.xpose.msra.mxu0 0
        %1200 = vmatprep.subr.bf16.mxu0 0
        %1201 = vmatpush1.bf16.xpose.msra.mxu0 0
        %1202 = vmatprep.mubr.bf16.mxu0 0
        %1203 = vmatmul.mubr.bf16.gmra.mrb[0].mxu0 %v1165
        %v1204 = vpop.f32.mrb[0].mxu0
        %v1205 = vadd.f32 0.0, %v1204
        %v1206 = vpop.f32.mrb[0].mxu0
        %v1207 = vpop.f32.mrb[0].mxu0
        %v1208 = vpop.f32.mrb[0].mxu0
        %1209 = vdwg.mxu0
        %v1210 = vsel %vm509, %v1205, -1e+30
        %v1211 = vsel %vm565, %v1210, -inf
        %1212 = vmax.xlane.f32.xlu0 %v1211
        %v1213 = vpop.xlane.xlu0 %1212
        %v1214 = vsub.f32 %v1210, %v1213
        %v1215 = vmul.f32 %v1214, 1.442695
        %v1216 = vpow.pop %v1215
        %v1217 = vsel %vm565, %v1216, 0.0
        %1218 = vadd.xlane.f32.xlu0 %v1217
        %v1219 = vpop.xlane.xlu0 %1218
        %v1220 = vrcp.pop %v1219
        %v1221 = vmul.f32 %v1216, %v1220
        %v1222 = vpack.c.bf16 %v1221, %v1221
        %1223 = vrot.lane.b32.xlu0 %v504, 48
        %v1224 = vpop.permute.xlu0 %1223
        %v1226 = vsel %vm565, %v1222, 0
        %v1229 = vsel %vm583, %v1224, 0
        %1231 = vmatprep.subr.bf16.mxu0 0
        %1232 = vmatpush1.bf16.msra.mxu0 %v1229
        %1233 = vmatprep.subr.bf16.mxu0 0
        %1234 = vmatpush1.bf16.msra.mxu0 0
        %1235 = vmatprep.subr.bf16.mxu0 0
        %1236 = vmatpush1.bf16.msra.mxu0 0
        %1237 = vmatprep.subr.bf16.mxu0 0
        %1238 = vmatpush1.bf16.msra.mxu0 0
        %1239 = vmatprep.subr.bf16.mxu0 0
        %1240 = vmatpush1.bf16.msra.mxu0 0
        %1241 = vmatprep.subr.bf16.mxu0 0
        %1242 = vmatpush1.bf16.msra.mxu0 0
        %1243 = vmatprep.subr.bf16.mxu0 0
        %1244 = vmatpush1.bf16.msra.mxu0 0
        %1245 = vmatprep.subr.bf16.mxu0 0
        %1246 = vmatpush1.bf16.msra.mxu0 0
        %1247 = vmatprep.subr.bf16.mxu0 0
        %1248 = vmatpush1.bf16.msra.mxu0 0
        %1249 = vmatprep.subr.bf16.mxu0 0
        %1250 = vmatpush1.bf16.msra.mxu0 0
        %1251 = vmatprep.subr.bf16.mxu0 0
        %1252 = vmatpush1.bf16.msra.mxu0 0
        %1253 = vmatprep.subr.bf16.mxu0 0
        %1254 = vmatpush1.bf16.msra.mxu0 0
        %1255 = vmatprep.subr.bf16.mxu0 0
        %1256 = vmatpush1.bf16.msra.mxu0 0
        %1257 = vmatprep.subr.bf16.mxu0 0
        %1258 = vmatpush1.bf16.msra.mxu0 0
        %1259 = vmatprep.subr.bf16.mxu0 0
        %1260 = vmatpush1.bf16.msra.mxu0 0
        %1261 = vmatprep.subr.bf16.mxu0 0
        %1262 = vmatpush1.bf16.msra.mxu0 0
        %1263 = vmatprep.mubr.bf16.mxu0 0
        %1264 = vmatmul.mubr.bf16.gmra.mrb[0].mxu0 %v1226
        %v1265 = vpop.f32.mrb[0].mxu0
        %v1266 = vadd.f32 0.0, %v1265
        %v1267 = vpop.f32.mrb[0].mxu0
        %v1268 = vpop.f32.mrb[0].mxu0
        %v1269 = vpop.f32.mrb[0].mxu0
        %1270 = vdwg.mxu0
        %v1271 = vpack.c.bf16 %v1266, %v1266
        %v1273 = vsel %vm517, %v1271, 0
        %v1276 = vsel %vm748, %v512, 0
        %1278 = vmatprep.subr.bf16.mxu0 0
        %1279 = vmatpush1.bf16.msra.mxu0 %v1276
        %1280 = vmatprep.subr.bf16.mxu0 0
        %1281 = vmatpush1.bf16.msra.mxu0 0
        %1282 = vmatprep.subr.bf16.mxu0 0
        %1283 = vmatpush1.bf16.msra.mxu0 0
        %1284 = vmatprep.subr.bf16.mxu0 0
        %1285 = vmatpush1.bf16.msra.mxu0 0
        %1286 = vmatprep.subr.bf16.mxu0 0
        %1287 = vmatpush1.bf16.msra.mxu0 0
        %1288 = vmatprep.subr.bf16.mxu0 0
        %1289 = vmatpush1.bf16.msra.mxu0 0
        %1290 = vmatprep.subr.bf16.mxu0 0
        %1291 = vmatpush1.bf16.msra.mxu0 0
        %1292 = vmatprep.subr.bf16.mxu0 0
        %1293 = vmatpush1.bf16.msra.mxu0 0
        %1294 = vmatprep.subr.bf16.mxu0 0
        %1295 = vmatpush1.bf16.msra.mxu0 0
        %1296 = vmatprep.subr.bf16.mxu0 0
        %1297 = vmatpush1.bf16.msra.mxu0 0
        %1298 = vmatprep.subr.bf16.mxu0 0
        %1299 = vmatpush1.bf16.msra.mxu0 0
        %1300 = vmatprep.subr.bf16.mxu0 0
        %1301 = vmatpush1.bf16.msra.mxu0 0
        %1302 = vmatprep.subr.bf16.mxu0 0
        %1303 = vmatpush1.bf16.msra.mxu0 0
        %1304 = vmatprep.subr.bf16.mxu0 0
        %1305 = vmatpush1.bf16.msra.mxu0 0
        %1306 = vmatprep.subr.bf16.mxu0 0
        %1307 = vmatpush1.bf16.msra.mxu0 0
        %1308 = vmatprep.subr.bf16.mxu0 0
        %1309 = vmatpush1.bf16.msra.mxu0 0
        %1310 = vmatprep.mubr.bf16.mxu0 0
        %1311 = vmatmul.mubr.bf16.gmra.mrb[0].mxu0 %v1273
        %v1312 = vpop.f32.mrb[0].mxu0
        %v1313 = vadd.f32 0.0, %v1312
        %v1314 = vpop.f32.mrb[0].mxu0
        %v1315 = vpop.f32.mrb[0].mxu0
        %v1316 = vpop.f32.mrb[0].mxu0
        %1317 = vdwg.mxu0
        %v1318 = vadd.f32 %v1159, %v1313
        %1319 = vrot.lane.b32.xlu0 %v503, 108
        %v1320 = vpop.permute.xlu0 %1319
        %1321 = vrot.lane.b32.xlu0 %v504, 76
        %v1322 = vpop.permute.xlu0 %1321
        %v1324 = vsel %vm517, %v1320, 0
        %v1327 = vsel %vm517, %v1322, 0
        %1329 = vmatprep.subr.bf16.mxu0 0
        %1330 = vmatpush1.bf16.xpose.msra.mxu0 %v1327
        %1331 = vmatprep.subr.bf16.mxu0 0
        %1332 = vmatpush1.bf16.xpose.msra.mxu0 0
        %1333 = vmatprep.subr.bf16.mxu0 0
        %1334 = vmatpush1.bf16.xpose.msra.mxu0 0
        %1335 = vmatprep.subr.bf16.mxu0 0
        %1336 = vmatpush1.bf16.xpose.msra.mxu0 0
        %1337 = vmatprep.subr.bf16.mxu0 0
        %1338 = vmatpush1.bf16.xpose.msra.mxu0 0
        %1339 = vmatprep.subr.bf16.mxu0 0
        %1340 = vmatpush1.bf16.xpose.msra.mxu0 0
        %1341 = vmatprep.subr.bf16.mxu0 0
        %1342 = vmatpush1.bf16.xpose.msra.mxu0 0
        %1343 = vmatprep.subr.bf16.mxu0 0
        %1344 = vmatpush1.bf16.xpose.msra.mxu0 0
        %1345 = vmatprep.subr.bf16.mxu0 0
        %1346 = vmatpush1.bf16.xpose.msra.mxu0 0
        %1347 = vmatprep.subr.bf16.mxu0 0
        %1348 = vmatpush1.bf16.xpose.msra.mxu0 0
        %1349 = vmatprep.subr.bf16.mxu0 0
        %1350 = vmatpush1.bf16.xpose.msra.mxu0 0
        %1351 = vmatprep.subr.bf16.mxu0 0
        %1352 = vmatpush1.bf16.xpose.msra.mxu0 0
        %1353 = vmatprep.subr.bf16.mxu0 0
        %1354 = vmatpush1.bf16.xpose.msra.mxu0 0
        %1355 = vmatprep.subr.bf16.mxu0 0
        %1356 = vmatpush1.bf16.xpose.msra.mxu0 0
        %1357 = vmatprep.subr.bf16.mxu0 0
        %1358 = vmatpush1.bf16.xpose.msra.mxu0 0
        %1359 = vmatprep.subr.bf16.mxu0 0
        %1360 = vmatpush1.bf16.xpose.msra.mxu0 0
        %1361 = vmatprep.mubr.bf16.mxu0 0
        %1362 = vmatmul.mubr.bf16.gmra.mrb[0].mxu0 %v1324
        %v1363 = vpop.f32.mrb[0].mxu0
        %v1364 = vadd.f32 0.0, %v1363
        %v1365 = vpop.f32.mrb[0].mxu0
        %v1366 = vpop.f32.mrb[0].mxu0
        %v1367 = vpop.f32.mrb[0].mxu0
        %1368 = vdwg.mxu0
        %v1369 = vsel %vm509, %v1364, -1e+30
        %v1370 = vsel %vm565, %v1369, -inf
        %1371 = vmax.xlane.f32.xlu0 %v1370
        %v1372 = vpop.xlane.xlu0 %1371
        %v1373 = vsub.f32 %v1369, %v1372
        %v1374 = vmul.f32 %v1373, 1.442695
        %v1375 = vpow.pop %v1374
        %v1376 = vsel %vm565, %v1375, 0.0
        %1377 = vadd.xlane.f32.xlu0 %v1376
        %v1378 = vpop.xlane.xlu0 %1377
        %v1379 = vrcp.pop %v1378
        %v1380 = vmul.f32 %v1375, %v1379
        %v1381 = vpack.c.bf16 %v1380, %v1380
        %1382 = vrot.lane.b32.xlu0 %v504, 44
        %v1383 = vpop.permute.xlu0 %1382
        %v1385 = vsel %vm565, %v1381, 0
        %v1388 = vsel %vm583, %v1383, 0
        %1390 = vmatprep.subr.bf16.mxu0 0
        %1391 = vmatpush1.bf16.msra.mxu0 %v1388
        %1392 = vmatprep.subr.bf16.mxu0 0
        %1393 = vmatpush1.bf16.msra.mxu0 0
        %1394 = vmatprep.subr.bf16.mxu0 0
        %1395 = vmatpush1.bf16.msra.mxu0 0
        %1396 = vmatprep.subr.bf16.mxu0 0
        %1397 = vmatpush1.bf16.msra.mxu0 0
        %1398 = vmatprep.subr.bf16.mxu0 0
        %1399 = vmatpush1.bf16.msra.mxu0 0
        %1400 = vmatprep.subr.bf16.mxu0 0
        %1401 = vmatpush1.bf16.msra.mxu0 0
        %1402 = vmatprep.subr.bf16.mxu0 0
        %1403 = vmatpush1.bf16.msra.mxu0 0
        %1404 = vmatprep.subr.bf16.mxu0 0
        %1405 = vmatpush1.bf16.msra.mxu0 0
        %1406 = vmatprep.subr.bf16.mxu0 0
        %1407 = vmatpush1.bf16.msra.mxu0 0
        %1408 = vmatprep.subr.bf16.mxu0 0
        %1409 = vmatpush1.bf16.msra.mxu0 0
        %1410 = vmatprep.subr.bf16.mxu0 0
        %1411 = vmatpush1.bf16.msra.mxu0 0
        %1412 = vmatprep.subr.bf16.mxu0 0
        %1413 = vmatpush1.bf16.msra.mxu0 0
        %1414 = vmatprep.subr.bf16.mxu0 0
        %1415 = vmatpush1.bf16.msra.mxu0 0
        %1416 = vmatprep.subr.bf16.mxu0 0
        %1417 = vmatpush1.bf16.msra.mxu0 0
        %1418 = vmatprep.subr.bf16.mxu0 0
        %1419 = vmatpush1.bf16.msra.mxu0 0
        %1420 = vmatprep.subr.bf16.mxu0 0
        %1421 = vmatpush1.bf16.msra.mxu0 0
        %1422 = vmatprep.mubr.bf16.mxu0 0
        %1423 = vmatmul.mubr.bf16.gmra.mrb[0].mxu0 %v1385
        %v1424 = vpop.f32.mrb[0].mxu0
        %v1425 = vadd.f32 0.0, %v1424
        %v1426 = vpop.f32.mrb[0].mxu0
        %v1427 = vpop.f32.mrb[0].mxu0
        %v1428 = vpop.f32.mrb[0].mxu0
        %1429 = vdwg.mxu0
        %v1430 = vpack.c.bf16 %v1425, %v1425
        %v1432 = vunpack.c.l.b16 %v512
        %v1433 = vpack.c.b16 %v1432, %v1432
        %v1434 = vrot.slane %v1433, 2
        %v1436 = vsel %vm517, %v1430, 0
        %v1439 = vsel %vm748, %v1434, 0
        %1441 = vmatprep.subr.bf16.mxu0 0
        %1442 = vmatpush1.bf16.msra.mxu0 %v1439
        %1443 = vmatprep.subr.bf16.mxu0 0
        %1444 = vmatpush1.bf16.msra.mxu0 0
        %1445 = vmatprep.subr.bf16.mxu0 0
        %1446 = vmatpush1.bf16.msra.mxu0 0
        %1447 = vmatprep.subr.bf16.mxu0 0
        %1448 = vmatpush1.bf16.msra.mxu0 0
        %1449 = vmatprep.subr.bf16.mxu0 0
        %1450 = vmatpush1.bf16.msra.mxu0 0
        %1451 = vmatprep.subr.bf16.mxu0 0
        %1452 = vmatpush1.bf16.msra.mxu0 0
        %1453 = vmatprep.subr.bf16.mxu0 0
        %1454 = vmatpush1.bf16.msra.mxu0 0
        %1455 = vmatprep.subr.bf16.mxu0 0
        %1456 = vmatpush1.bf16.msra.mxu0 0
        %1457 = vmatprep.subr.bf16.mxu0 0
        %1458 = vmatpush1.bf16.msra.mxu0 0
        %1459 = vmatprep.subr.bf16.mxu0 0
        %1460 = vmatpush1.bf16.msra.mxu0 0
        %1461 = vmatprep.subr.bf16.mxu0 0
        %1462 = vmatpush1.bf16.msra.mxu0 0
        %1463 = vmatprep.subr.bf16.mxu0 0
        %1464 = vmatpush1.bf16.msra.mxu0 0
        %1465 = vmatprep.subr.bf16.mxu0 0
        %1466 = vmatpush1.bf16.msra.mxu0 0
        %1467 = vmatprep.subr.bf16.mxu0 0
        %1468 = vmatpush1.bf16.msra.mxu0 0
        %1469 = vmatprep.subr.bf16.mxu0 0
        %1470 = vmatpush1.bf16.msra.mxu0 0
        %1471 = vmatprep.subr.bf16.mxu0 0
        %1472 = vmatpush1.bf16.msra.mxu0 0
        %1473 = vmatprep.mubr.bf16.mxu0 0
        %1474 = vmatmul.mubr.bf16.gmra.mrb[0].mxu0 %v1436
        %v1475 = vpop.f32.mrb[0].mxu0
        %v1476 = vadd.f32 0.0, %v1475
        %v1477 = vpop.f32.mrb[0].mxu0
        %v1478 = vpop.f32.mrb[0].mxu0
        %v1479 = vpop.f32.mrb[0].mxu0
        %1480 = vdwg.mxu0
        %v1481 = vadd.f32 %v1318, %v1476
        %1482 = vrot.lane.b32.xlu0 %v503, 104
        %v1483 = vpop.permute.xlu0 %1482
        %1484 = vrot.lane.b32.xlu0 %v504, 72
        %v1485 = vpop.permute.xlu0 %1484
        %v1487 = vsel %vm517, %v1483, 0
        %v1490 = vsel %vm517, %v1485, 0
        %1492 = vmatprep.subr.bf16.mxu0 0
        %1493 = vmatpush1.bf16.xpose.msra.mxu0 %v1490
        %1494 = vmatprep.subr.bf16.mxu0 0
        %1495 = vmatpush1.bf16.xpose.msra.mxu0 0
        %1496 = vmatprep.subr.bf16.mxu0 0
        %1497 = vmatpush1.bf16.xpose.msra.mxu0 0
        %1498 = vmatprep.subr.bf16.mxu0 0
        %1499 = vmatpush1.bf16.xpose.msra.mxu0 0
        %1500 = vmatprep.subr.bf16.mxu0 0
        %1501 = vmatpush1.bf16.xpose.msra.mxu0 0
        %1502 = vmatprep.subr.bf16.mxu0 0
        %1503 = vmatpush1.bf16.xpose.msra.mxu0 0
        %1504 = vmatprep.subr.bf16.mxu0 0
        %1505 = vmatpush1.bf16.xpose.msra.mxu0 0
        %1506 = vmatprep.subr.bf16.mxu0 0
        %1507 = vmatpush1.bf16.xpose.msra.mxu0 0
        %1508 = vmatprep.subr.bf16.mxu0 0
        %1509 = vmatpush1.bf16.xpose.msra.mxu0 0
        %1510 = vmatprep.subr.bf16.mxu0 0
        %1511 = vmatpush1.bf16.xpose.msra.mxu0 0
        %1512 = vmatprep.subr.bf16.mxu0 0
        %1513 = vmatpush1.bf16.xpose.msra.mxu0 0
        %1514 = vmatprep.subr.bf16.mxu0 0
        %1515 = vmatpush1.bf16.xpose.msra.mxu0 0
        %1516 = vmatprep.subr.bf16.mxu0 0
        %1517 = vmatpush1.bf16.xpose.msra.mxu0 0
        %1518 = vmatprep.subr.bf16.mxu0 0
        %1519 = vmatpush1.bf16.xpose.msra.mxu0 0
        %1520 = vmatprep.subr.bf16.mxu0 0
        %1521 = vmatpush1.bf16.xpose.msra.mxu0 0
        %1522 = vmatprep.subr.bf16.mxu0 0
        %1523 = vmatpush1.bf16.xpose.msra.mxu0 0
        %1524 = vmatprep.mubr.bf16.mxu0 0
        %1525 = vmatmul.mubr.bf16.gmra.mrb[0].mxu0 %v1487
        %v1526 = vpop.f32.mrb[0].mxu0
        %v1527 = vadd.f32 0.0, %v1526
        %v1528 = vpop.f32.mrb[0].mxu0
        %v1529 = vpop.f32.mrb[0].mxu0
        %v1530 = vpop.f32.mrb[0].mxu0
        %1531 = vdwg.mxu0
        %v1532 = vsel %vm509, %v1527, -1e+30
        %v1533 = vsel %vm565, %v1532, -inf
        %1534 = vmax.xlane.f32.xlu0 %v1533
        %v1535 = vpop.xlane.xlu0 %1534
        %v1536 = vsub.f32 %v1532, %v1535
        %v1537 = vmul.f32 %v1536, 1.442695
        %v1538 = vpow.pop %v1537
        %v1539 = vsel %vm565, %v1538, 0.0
        %1540 = vadd.xlane.f32.xlu0 %v1539
        %v1541 = vpop.xlane.xlu0 %1540
        %v1542 = vrcp.pop %v1541
        %v1543 = vmul.f32 %v1538, %v1542
        %v1544 = vpack.c.bf16 %v1543, %v1543
        %1545 = vrot.lane.b32.xlu0 %v504, 40
        %v1546 = vpop.permute.xlu0 %1545
        %v1548 = vsel %vm565, %v1544, 0
        %v1551 = vsel %vm583, %v1546, 0
        %1553 = vmatprep.subr.bf16.mxu0 0
        %1554 = vmatpush1.bf16.msra.mxu0 %v1551
        %1555 = vmatprep.subr.bf16.mxu0 0
        %1556 = vmatpush1.bf16.msra.mxu0 0
        %1557 = vmatprep.subr.bf16.mxu0 0
        %1558 = vmatpush1.bf16.msra.mxu0 0
        %1559 = vmatprep.subr.bf16.mxu0 0
        %1560 = vmatpush1.bf16.msra.mxu0 0
        %1561 = vmatprep.subr.bf16.mxu0 0
        %1562 = vmatpush1.bf16.msra.mxu0 0
        %1563 = vmatprep.subr.bf16.mxu0 0
        %1564 = vmatpush1.bf16.msra.mxu0 0
        %1565 = vmatprep.subr.bf16.mxu0 0
        %1566 = vmatpush1.bf16.msra.mxu0 0
        %1567 = vmatprep.subr.bf16.mxu0 0
        %1568 = vmatpush1.bf16.msra.mxu0 0
        %1569 = vmatprep.subr.bf16.mxu0 0
        %1570 = vmatpush1.bf16.msra.mxu0 0
        %1571 = vmatprep.subr.bf16.mxu0 0
        %1572 = vmatpush1.bf16.msra.mxu0 0
        %1573 = vmatprep.subr.bf16.mxu0 0
        %1574 = vmatpush1.bf16.msra.mxu0 0
        %1575 = vmatprep.subr.bf16.mxu0 0
        %1576 = vmatpush1.bf16.msra.mxu0 0
        %1577 = vmatprep.subr.bf16.mxu0 0
        %1578 = vmatpush1.bf16.msra.mxu0 0
        %1579 = vmatprep.subr.bf16.mxu0 0
        %1580 = vmatpush1.bf16.msra.mxu0 0
        %1581 = vmatprep.subr.bf16.mxu0 0
        %1582 = vmatpush1.bf16.msra.mxu0 0
        %1583 = vmatprep.subr.bf16.mxu0 0
        %1584 = vmatpush1.bf16.msra.mxu0 0
        %1585 = vmatprep.mubr.bf16.mxu0 0
        %1586 = vmatmul.mubr.bf16.gmra.mrb[0].mxu0 %v1548
        %v1587 = vpop.f32.mrb[0].mxu0
        %v1588 = vadd.f32 0.0, %v1587
        %v1589 = vpop.f32.mrb[0].mxu0
        %v1590 = vpop.f32.mrb[0].mxu0
        %v1591 = vpop.f32.mrb[0].mxu0
        %1592 = vdwg.mxu0
        %v1593 = vpack.c.bf16 %v1588, %v1588
        %v1595 = vsel %vm517, %v1593, 0
        %v1598 = vsel %vm748, %v513, 0
        %1600 = vmatprep.subr.bf16.mxu0 0
        %1601 = vmatpush1.bf16.msra.mxu0 %v1598
        %1602 = vmatprep.subr.bf16.mxu0 0
        %1603 = vmatpush1.bf16.msra.mxu0 0
        %1604 = vmatprep.subr.bf16.mxu0 0
        %1605 = vmatpush1.bf16.msra.mxu0 0
        %1606 = vmatprep.subr.bf16.mxu0 0
        %1607 = vmatpush1.bf16.msra.mxu0 0
        %1608 = vmatprep.subr.bf16.mxu0 0
        %1609 = vmatpush1.bf16.msra.mxu0 0
        %1610 = vmatprep.subr.bf16.mxu0 0
        %1611 = vmatpush1.bf16.msra.mxu0 0
        %1612 = vmatprep.subr.bf16.mxu0 0
        %1613 = vmatpush1.bf16.msra.mxu0 0
        %1614 = vmatprep.subr.bf16.mxu0 0
        %1615 = vmatpush1.bf16.msra.mxu0 0
        %1616 = vmatprep.subr.bf16.mxu0 0
        %1617 = vmatpush1.bf16.msra.mxu0 0
        %1618 = vmatprep.subr.bf16.mxu0 0
        %1619 = vmatpush1.bf16.msra.mxu0 0
        %1620 = vmatprep.subr.bf16.mxu0 0
        %1621 = vmatpush1.bf16.msra.mxu0 0
        %1622 = vmatprep.subr.bf16.mxu0 0
        %1623 = vmatpush1.bf16.msra.mxu0 0
        %1624 = vmatprep.subr.bf16.mxu0 0
        %1625 = vmatpush1.bf16.msra.mxu0 0
        %1626 = vmatprep.subr.bf16.mxu0 0
        %1627 = vmatpush1.bf16.msra.mxu0 0
        %1628 = vmatprep.subr.bf16.mxu0 0
        %1629 = vmatpush1.bf16.msra.mxu0 0
        %1630 = vmatprep.subr.bf16.mxu0 0
        %1631 = vmatpush1.bf16.msra.mxu0 0
        %1632 = vmatprep.mubr.bf16.mxu0 0
        %1633 = vmatmul.mubr.bf16.gmra.mrb[0].mxu0 %v1595
        %v1634 = vpop.f32.mrb[0].mxu0
        %v1635 = vadd.f32 0.0, %v1634
        %v1636 = vpop.f32.mrb[0].mxu0
        %v1637 = vpop.f32.mrb[0].mxu0
        %v1638 = vpop.f32.mrb[0].mxu0
        %1639 = vdwg.mxu0
        %v1640 = vadd.f32 %v1481, %v1635
        %1641 = vrot.lane.b32.xlu0 %v503, 100
        %v1642 = vpop.permute.xlu0 %1641
        %1643 = vrot.lane.b32.xlu0 %v504, 68
        %v1644 = vpop.permute.xlu0 %1643
        %v1646 = vsel %vm517, %v1642, 0
        %v1649 = vsel %vm517, %v1644, 0
        %1651 = vmatprep.subr.bf16.mxu0 0
        %1652 = vmatpush1.bf16.xpose.msra.mxu0 %v1649
        %1653 = vmatprep.subr.bf16.mxu0 0
        %1654 = vmatpush1.bf16.xpose.msra.mxu0 0
        %1655 = vmatprep.subr.bf16.mxu0 0
        %1656 = vmatpush1.bf16.xpose.msra.mxu0 0
        %1657 = vmatprep.subr.bf16.mxu0 0
        %1658 = vmatpush1.bf16.xpose.msra.mxu0 0
        %1659 = vmatprep.subr.bf16.mxu0 0
        %1660 = vmatpush1.bf16.xpose.msra.mxu0 0
        %1661 = vmatprep.subr.bf16.mxu0 0
        %1662 = vmatpush1.bf16.xpose.msra.mxu0 0
        %1663 = vmatprep.subr.bf16.mxu0 0
        %1664 = vmatpush1.bf16.xpose.msra.mxu0 0
        %1665 = vmatprep.subr.bf16.mxu0 0
        %1666 = vmatpush1.bf16.xpose.msra.mxu0 0
        %1667 = vmatprep.subr.bf16.mxu0 0
        %1668 = vmatpush1.bf16.xpose.msra.mxu0 0
        %1669 = vmatprep.subr.bf16.mxu0 0
        %1670 = vmatpush1.bf16.xpose.msra.mxu0 0
        %1671 = vmatprep.subr.bf16.mxu0 0
        %1672 = vmatpush1.bf16.xpose.msra.mxu0 0
        %1673 = vmatprep.subr.bf16.mxu0 0
        %1674 = vmatpush1.bf16.xpose.msra.mxu0 0
        %1675 = vmatprep.subr.bf16.mxu0 0
        %1676 = vmatpush1.bf16.xpose.msra.mxu0 0
        %1677 = vmatprep.subr.bf16.mxu0 0
        %1678 = vmatpush1.bf16.xpose.msra.mxu0 0
        %1679 = vmatprep.subr.bf16.mxu0 0
        %1680 = vmatpush1.bf16.xpose.msra.mxu0 0
        %1681 = vmatprep.subr.bf16.mxu0 0
        %1682 = vmatpush1.bf16.xpose.msra.mxu0 0
        %1683 = vmatprep.mubr.bf16.mxu0 0
        %1684 = vmatmul.mubr.bf16.gmra.mrb[0].mxu0 %v1646
        %v1685 = vpop.f32.mrb[0].mxu0
        %v1686 = vadd.f32 0.0, %v1685
        %v1687 = vpop.f32.mrb[0].mxu0
        %v1688 = vpop.f32.mrb[0].mxu0
        %v1689 = vpop.f32.mrb[0].mxu0
        %1690 = vdwg.mxu0
        %v1691 = vsel %vm509, %v1686, -1e+30
        %v1692 = vsel %vm565, %v1691, -inf
        %1693 = vmax.xlane.f32.xlu0 %v1692
        %v1694 = vpop.xlane.xlu0 %1693
        %v1695 = vsub.f32 %v1691, %v1694
        %v1696 = vmul.f32 %v1695, 1.442695
        %v1697 = vpow.pop %v1696
        %v1698 = vsel %vm565, %v1697, 0.0
        %1699 = vadd.xlane.f32.xlu0 %v1698
        %v1700 = vpop.xlane.xlu0 %1699
        %v1701 = vrcp.pop %v1700
        %v1702 = vmul.f32 %v1697, %v1701
        %v1703 = vpack.c.bf16 %v1702, %v1702
        %1704 = vrot.lane.b32.xlu0 %v504, 36
        %v1705 = vpop.permute.xlu0 %1704
        %v1707 = vsel %vm565, %v1703, 0
        %v1710 = vsel %vm583, %v1705, 0
        %1712 = vmatprep.subr.bf16.mxu0 0
        %1713 = vmatpush1.bf16.msra.mxu0 %v1710
        %1714 = vmatprep.subr.bf16.mxu0 0
        %1715 = vmatpush1.bf16.msra.mxu0 0
        %1716 = vmatprep.subr.bf16.mxu0 0
        %1717 = vmatpush1.bf16.msra.mxu0 0
        %1718 = vmatprep.subr.bf16.mxu0 0
        %1719 = vmatpush1.bf16.msra.mxu0 0
        %1720 = vmatprep.subr.bf16.mxu0 0
        %1721 = vmatpush1.bf16.msra.mxu0 0
        %1722 = vmatprep.subr.bf16.mxu0 0
        %1723 = vmatpush1.bf16.msra.mxu0 0
        %1724 = vmatprep.subr.bf16.mxu0 0
        %1725 = vmatpush1.bf16.msra.mxu0 0
        %1726 = vmatprep.subr.bf16.mxu0 0
        %1727 = vmatpush1.bf16.msra.mxu0 0
        %1728 = vmatprep.subr.bf16.mxu0 0
        %1729 = vmatpush1.bf16.msra.mxu0 0
        %1730 = vmatprep.subr.bf16.mxu0 0
        %1731 = vmatpush1.bf16.msra.mxu0 0
        %1732 = vmatprep.subr.bf16.mxu0 0
        %1733 = vmatpush1.bf16.msra.mxu0 0
        %1734 = vmatprep.subr.bf16.mxu0 0
        %1735 = vmatpush1.bf16.msra.mxu0 0
        %1736 = vmatprep.subr.bf16.mxu0 0
        %1737 = vmatpush1.bf16.msra.mxu0 0
        %1738 = vmatprep.subr.bf16.mxu0 0
        %1739 = vmatpush1.bf16.msra.mxu0 0
        %1740 = vmatprep.subr.bf16.mxu0 0
        %1741 = vmatpush1.bf16.msra.mxu0 0
        %1742 = vmatprep.subr.bf16.mxu0 0
        %1743 = vmatpush1.bf16.msra.mxu0 0
        %1744 = vmatprep.mubr.bf16.mxu0 0
        %1745 = vmatmul.mubr.bf16.gmra.mrb[0].mxu0 %v1707
        %v1746 = vpop.f32.mrb[0].mxu0
        %v1747 = vadd.f32 0.0, %v1746
        %v1748 = vpop.f32.mrb[0].mxu0
        %v1749 = vpop.f32.mrb[0].mxu0
        %v1750 = vpop.f32.mrb[0].mxu0
        %1751 = vdwg.mxu0
        %v1752 = vpack.c.bf16 %v1747, %v1747
        %v1754 = vunpack.c.l.b16 %v513
        %v1755 = vpack.c.b16 %v1754, %v1754
        %v1756 = vrot.slane %v1755, 2
        %v1758 = vsel %vm517, %v1752, 0
        %v1761 = vsel %vm748, %v1756, 0
        %1763 = vmatprep.subr.bf16.mxu0 0
        %1764 = vmatpush1.bf16.msra.mxu0 %v1761
        %1765 = vmatprep.subr.bf16.mxu0 0
        %1766 = vmatpush1.bf16.msra.mxu0 0
        %1767 = vmatprep.subr.bf16.mxu0 0
        %1768 = vmatpush1.bf16.msra.mxu0 0
        %1769 = vmatprep.subr.bf16.mxu0 0
        %1770 = vmatpush1.bf16.msra.mxu0 0
        %1771 = vmatprep.subr.bf16.mxu0 0
        %1772 = vmatpush1.bf16.msra.mxu0 0
        %1773 = vmatprep.subr.bf16.mxu0 0
        %1774 = vmatpush1.bf16.msra.mxu0 0
        %1775 = vmatprep.subr.bf16.mxu0 0
        %1776 = vmatpush1.bf16.msra.mxu0 0
        %1777 = vmatprep.subr.bf16.mxu0 0
        %1778 = vmatpush1.bf16.msra.mxu0 0
        %1779 = vmatprep.subr.bf16.mxu0 0
        %1780 = vmatpush1.bf16.msra.mxu0 0
        %1781 = vmatprep.subr.bf16.mxu0 0
        %1782 = vmatpush1.bf16.msra.mxu0 0
        %1783 = vmatprep.subr.bf16.mxu0 0
        %1784 = vmatpush1.bf16.msra.mxu0 0
        %1785 = vmatprep.subr.bf16.mxu0 0
        %1786 = vmatpush1.bf16.msra.mxu0 0
        %1787 = vmatprep.subr.bf16.mxu0 0
        %1788 = vmatpush1.bf16.msra.mxu0 0
        %1789 = vmatprep.subr.bf16.mxu0 0
        %1790 = vmatpush1.bf16.msra.mxu0 0
        %1791 = vmatprep.subr.bf16.mxu0 0
        %1792 = vmatpush1.bf16.msra.mxu0 0
        %1793 = vmatprep.subr.bf16.mxu0 0
        %1794 = vmatpush1.bf16.msra.mxu0 0
        %1795 = vmatprep.mubr.bf16.mxu0 0
        %1796 = vmatmul.mubr.bf16.gmra.mrb[0].mxu0 %v1758
        %v1797 = vpop.f32.mrb[0].mxu0
        %v1798 = vadd.f32 0.0, %v1797
        %v1799 = vpop.f32.mrb[0].mxu0
        %v1800 = vpop.f32.mrb[0].mxu0
        %v1801 = vpop.f32.mrb[0].mxu0
        %1802 = vdwg.mxu0
        %v1803 = vadd.f32 %v1640, %v1798
        %v1804 = vadd.f32 %v410, %v1803
        %v1805 = vld [vmem:[%s5] sm:$0x1]
        %v1807 = vlaneseq
        %v1808 = vshrl.u32 %v1807, 7
        %v1809 = vsub.s32 0, %v1808
        %v1810 = vrot.slane %v1805, %v1809
        %v1812 = vadd.f32 %v1804, %v1810
        %v1813 = vld [vmem:[%s6] sm:$0x1]
        %v1814 = vld [vmem:[%s7] sm:$0x1]
        %v1815 = vsel %vm413, %v1812, 0.0
        %1816 = vadd.xlane.f32.xlu0 %v1815
        %v1817 = vpop.xlane.xlu0 %1816
        %v1818 = vmul.f32 %v1817, %v417
        %v1819 = vsub.f32 %v1812, %v1818
        %v1820 = vmul.f32 %v1819, %v1819
        %v1821 = vsel %vm413, %v1820, 0.0
        %1822 = vadd.xlane.f32.xlu0 %v1821
        %v1823 = vpop.xlane.xlu0 %1822
        %v1824 = vmul.f32 %v1823, %v417
        %v1825 = vadd.f32 %v1824, 1e-05
        %v1826 = vrsqrt.pop %v1825
        %v1827 = vmul.f32 %v1819, %v1826
        %v1829 = vlaneseq
        %v1830 = vshrl.u32 %v1829, 7
        %v1831 = vsub.s32 0, %v1830
        %v1832 = vrot.slane %v1813, %v1831
        %v1834 = vmul.f32 %v1827, %v1832
        %v1836 = vlaneseq
        %v1837 = vshrl.u32 %v1836, 7
        %v1838 = vsub.s32 0, %v1837
        %v1839 = vrot.slane %v1814, %v1838
        %v1841 = vadd.f32 %v1834, %v1839
        %v1842 = vpack.c.bf16 %v1841, %v1841
        %v1843 = vld [vmem:[%s8] sm:$0xf]
        %v1844 = vld [vmem:[%s8 + $0x4] sm:$0xf]
        %v1845 = vld [vmem:[%s8 + $0x8] sm:$0xf]
        %v1846 = vld [vmem:[%s8 + $0xc] sm:$0xf]
        %v1847 = vld [vmem:[%s9] sm:$0x1]
        %v1849 = vlaneseq
        %v1850 = vshrl.u32 %v1849, 7
        %v1851 = vsub.s32 0, %v1850
        %v1852 = vrot.slane %v1847, %v1851
        %v1858 = vunpack.c.l.b16 %v1843
        %v1859 = vunpack.c.l.b16 %v1844
        %v1860 = vunpack.c.l.b16 %v1845
        %v1861 = vunpack.c.l.b16 %v1846
        %v1862 = vpack.c.b16 %v1859, %v1858
        %v1863 = vpack.c.b16 %v1861, %v1860
        %v1867 = vsel %vm413, %v1842, 0
        %1869 = vmatprep.subr.bf16.mxu0 0
        %1870 = vmatpush1.bf16.msra.mxu0 %v1862
        %1871 = vmatprep.subr.bf16.mxu0 0
        %1872 = vmatpush1.bf16.msra.mxu0 %v1863
        %1873 = vmatprep.subr.bf16.mxu0 0
        %1874 = vmatpush1.bf16.msra.mxu0 0
        %1875 = vmatprep.subr.bf16.mxu0 0
        %1876 = vmatpush1.bf16.msra.mxu0 0
        %1877 = vmatprep.subr.bf16.mxu0 0
        %1878 = vmatpush1.bf16.msra.mxu0 0
        %1879 = vmatprep.subr.bf16.mxu0 0
        %1880 = vmatpush1.bf16.msra.mxu0 0
        %1881 = vmatprep.subr.bf16.mxu0 0
        %1882 = vmatpush1.bf16.msra.mxu0 0
        %1883 = vmatprep.subr.bf16.mxu0 0
        %1884 = vmatpush1.bf16.msra.mxu0 0
        %1885 = vmatprep.subr.bf16.mxu0 0
        %1886 = vmatpush1.bf16.msra.mxu0 0
        %1887 = vmatprep.subr.bf16.mxu0 0
        %1888 = vmatpush1.bf16.msra.mxu0 0
        %1889 = vmatprep.subr.bf16.mxu0 0
        %1890 = vmatpush1.bf16.msra.mxu0 0
        %1891 = vmatprep.subr.bf16.mxu0 0
        %1892 = vmatpush1.bf16.msra.mxu0 0
        %1893 = vmatprep.subr.bf16.mxu0 0
        %1894 = vmatpush1.bf16.msra.mxu0 0
        %1895 = vmatprep.subr.bf16.mxu0 0
        %1896 = vmatpush1.bf16.msra.mxu0 0
        %1897 = vmatprep.subr.bf16.mxu0 0
        %1898 = vmatpush1.bf16.msra.mxu0 0
        %1899 = vmatprep.subr.bf16.mxu0 0
        %1900 = vmatpush1.bf16.msra.mxu0 0
        %1901 = vmatprep.mubr.bf16.mxu0 0
        %1902 = vmatmul.mubr.bf16.gmra.mrb[0].mxu0 %v1867
        %v1903 = vpop.f32.mrb[0].mxu0
        %v1904 = vadd.f32 %v1852, %v1903
        %v1905 = vpop.f32.mrb[0].mxu0
        %v1906 = vpop.f32.mrb[0].mxu0
        %v1907 = vpop.f32.mrb[0].mxu0
        %1908 = vdwg.mxu0
        %v1909 = vmax.f32 %v1904, 0.0
        %v1910 = vpack.c.bf16 %v1909, %v1909
        %v1911 = vld [vmem:[%s10] sm:$0xf]
        %v1912 = vld [vmem:[%s10 + $0x4] sm:$0xf]
        %v1913 = vld [vmem:[%s10 + $0x8] sm:$0xf]
        %v1914 = vld [vmem:[%s10 + $0xc] sm:$0xf]
        %v1915 = vld [vmem:[%s10 + $0x10] sm:$0xf]
        %v1916 = vld [vmem:[%s10 + $0x14] sm:$0xf]
        %v1917 = vld [vmem:[%s10 + $0x18] sm:$0xf]
        %v1918 = vld [vmem:[%s10 + $0x1c] sm:$0xf]
        %v1919 = vld [vmem:[%s10 + $0x20] sm:$0xf]
        %v1920 = vld [vmem:[%s10 + $0x24] sm:$0xf]
        %v1921 = vld [vmem:[%s10 + $0x28] sm:$0xf]
        %v1922 = vld [vmem:[%s10 + $0x2c] sm:$0xf]
        %v1923 = vld [vmem:[%s10 + $0x30] sm:$0xf]
        %v1924 = vld [vmem:[%s10 + $0x34] sm:$0xf]
        %v1925 = vld [vmem:[%s10 + $0x38] sm:$0xf]
        %v1926 = vld [vmem:[%s10 + $0x3c] sm:$0xf]
        %v1927 = vld [vmem:[%s11] sm:$0x1]
        %v1929 = vlaneseq
        %v1930 = vshrl.u32 %v1929, 7
        %v1931 = vsub.s32 0, %v1930
        %v1932 = vrot.slane %v1927, %v1931
        %v1950 = vunpack.c.l.b16 %v1911
        %v1951 = vunpack.c.l.b16 %v1912
        %v1952 = vunpack.c.l.b16 %v1913
        %v1953 = vunpack.c.l.b16 %v1914
        %v1954 = vunpack.c.l.b16 %v1915
        %v1955 = vunpack.c.l.b16 %v1916
        %v1956 = vunpack.c.l.b16 %v1917
        %v1957 = vunpack.c.l.b16 %v1918
        %v1958 = vunpack.c.l.b16 %v1919
        %v1959 = vunpack.c.l.b16 %v1920
        %v1960 = vunpack.c.l.b16 %v1921
        %v1961 = vunpack.c.l.b16 %v1922
        %v1962 = vunpack.c.l.b16 %v1923
        %v1963 = vunpack.c.l.b16 %v1924
        %v1964 = vunpack.c.l.b16 %v1925
        %v1965 = vunpack.c.l.b16 %v1926
        %v1966 = vpack.c.b16 %v1951, %v1950
        %v1967 = vpack.c.b16 %v1953, %v1952
        %v1968 = vpack.c.b16 %v1955, %v1954
        %v1969 = vpack.c.b16 %v1957, %v1956
        %v1970 = vpack.c.b16 %v1959, %v1958
        %v1971 = vpack.c.b16 %v1961, %v1960
        %v1972 = vpack.c.b16 %v1963, %v1962
        %v1973 = vpack.c.b16 %v1965, %v1964
        %1982 = vmatprep.subr.bf16.mxu0 0
        %1983 = vmatpush1.bf16.msra.mxu0 %v1966
        %1984 = vmatprep.subr.bf16.mxu0 0
        %1985 = vmatpush1.bf16.msra.mxu0 %v1967
        %1986 = vmatprep.subr.bf16.mxu0 0
        %1987 = vmatpush1.bf16.msra.mxu0 %v1968
        %1988 = vmatprep.subr.bf16.mxu0 0
        %1989 = vmatpush1.bf16.msra.mxu0 %v1969
        %1990 = vmatprep.subr.bf16.mxu0 0
        %1991 = vmatpush1.bf16.msra.mxu0 %v1970
        %1992 = vmatprep.subr.bf16.mxu0 0
        %1993 = vmatpush1.bf16.msra.mxu0 %v1971
        %1994 = vmatprep.subr.bf16.mxu0 0
        %1995 = vmatpush1.bf16.msra.mxu0 %v1972
        %1996 = vmatprep.subr.bf16.mxu0 0
        %1997 = vmatpush1.bf16.msra.mxu0 %v1973
        %1998 = vmatprep.subr.bf16.mxu0 0
        %1999 = vmatpush1.bf16.msra.mxu0 0
        %2000 = vmatprep.subr.bf16.mxu0 0
        %2001 = vmatpush1.bf16.msra.mxu0 0
        %2002 = vmatprep.subr.bf16.mxu0 0
        %2003 = vmatpush1.bf16.msra.mxu0 0
        %2004 = vmatprep.subr.bf16.mxu0 0
        %2005 = vmatpush1.bf16.msra.mxu0 0
        %2006 = vmatprep.subr.bf16.mxu0 0
        %2007 = vmatpush1.bf16.msra.mxu0 0
        %2008 = vmatprep.subr.bf16.mxu0 0
        %2009 = vmatpush1.bf16.msra.mxu0 0
        %2010 = vmatprep.subr.bf16.mxu0 0
        %2011 = vmatpush1.bf16.msra.mxu0 0
        %2012 = vmatprep.subr.bf16.mxu0 0
        %2013 = vmatpush1.bf16.msra.mxu0 0
        %2014 = vmatprep.mubr.bf16.mxu0 0
        %2015 = vmatmul.mubr.bf16.gmra.mrb[0].mxu0 %v1910
        %v2016 = vpop.f32.mrb[0].mxu0
        %v2017 = vadd.f32 %v1932, %v2016
        %v2018 = vpop.f32.mrb[0].mxu0
        %v2019 = vpop.f32.mrb[0].mxu0
        %v2020 = vpop.f32.mrb[0].mxu0
        %2021 = vdwg.mxu0
        %v2022 = vadd.f32 %v1812, %v2017
        %2023 = vst.msk [vmem:[%s404] sm:$0xff] %vm413, %v2022
        %s2024 = sand.u32 %s291, 1
        %s2025 = scalar_lea.sflag [#allocation3], %s2024
        %s2026 = sand.u32 %s291, 1
        %s2027 = smul.addr %s2026, 8
        %s2028 = scalar_lea.vmem [#allocation2], %s2027
        // Predicated region
        $region69: #{tpu_custom_call.1} parent=67 // pred_check
          %p2029 = pneg %p301
        $region70: #{tpu_custom_call.1} parent=67 // pred_check_branch
          %2031 = sbr.rel (%p2029) target = $region72
        $region71: #{tpu_custom_call.1} parent=67 // pred_region
          %s2033 = ssub.s32 128, 128
          %2034 = vsyncadd %s2025, %s2033
          %s2035 = smul.addr %s26, 128
          %s2036 = scalar_lea.hbm %s12, %s2035
          %s2038 = sshll.u32 %s2028, 4
          %s2039 = int_to_ptr.vmem [resolvable:$true] %s2038
          %2041 = dma.vmem_to_hbm [thread:$0]  %s2039, 128, %s2036, %s2025
        $region72: #{tpu_custom_call.1} parent=67 // pred_fallthru
          _
      $region68: #{tpu_custom_call.1} parent=5 // pred_fallthru
        _
      %p2042 = scmp.le.s32.totalorder 2, %s21
      // Predicated region
      $region73: #{tpu_custom_call.1} parent=5 // pred_check
        %p2043 = pneg %p2042
      $region74: #{tpu_custom_call.1} parent=5 // pred_check_branch
        %2045 = sbr.rel (%p2043) target = $region76
      $region75: #{tpu_custom_call.1} parent=5 // pred_region
        %s2046 = ssub.s32 %s21, 2
        // Predicated region
        $region77: #{tpu_custom_call.1} parent=75 // pred_check
          %p2047 = pneg %p307
        $region78: #{tpu_custom_call.1} parent=75 // pred_check_branch
          %2049 = sbr.rel (%p2047) target = $region80
        $region79: #{tpu_custom_call.1} parent=75 // pred_region
          %s2050 = sand.u32 %s292, 1
          %s2051 = scalar_lea.sflag [#allocation3], %s2050
          %s2052 = sand.u32 %s292, 1
          %s2053 = smul.addr %s2052, 8
          %s2054 = scalar_lea.vmem [#allocation2], %s2053
          %2055 = dma.done %s2051, 128
        $region80: #{tpu_custom_call.1} parent=75 // pred_fallthru
          _
      $region76: #{tpu_custom_call.1} parent=5 // pred_fallthru
        _
    $region6: #{tpu_custom_call.1} parent=1 // loop_footer
      %s25 = sadd.s32 1, %s21
    $region7: #{tpu_custom_call.1} parent=1 // loop_footer_branch
      %20 = sbr.rel target = $region3
    $region8: #{tpu_custom_call.1} parent=1 // loop_exit
      _
    %2056 = vsyncpa [#allocation3], 1
    %s2057 = scalar_lea.sflag [#allocation3], 1
    %2058 = vsyncpa %s2057, 1

</llo_original>
